<compile_context>
chip_gen: v7x
topology: tpu7x:2x2x1
jax: 0.10.0
libtpu: 0.0.40
codegen_flags: <defaults>
</compile_context>

<pallas_src>
import jax
import jax.numpy as jnp
from jax import lax
from jax.experimental import pallas as pl
from jax.experimental.pallas import tpu as pltpu


def _round_up(x, m):
    return (x + m - 1) // m * m


def _sigmoid_eup(x):
    # exp + approximate reciprocal both land on the EUP slot, keeping the gate
    # nonlinearity off the VALU on the serial per-timestep path.
    return pl.reciprocal(1.0 + jnp.exp(-x), approx=True)


def gru_fc_kernel(emb_ref, wih_ref, whh_ref, bi_ref, bhn_ref, wfc_ref, bfc_ref,
                  out_ref, xi_ref):
    T, TB, E = emb_ref.shape
    Hp = whh_ref.shape[0]          # padded hidden (multiple of 128)
    H3 = whh_ref.shape[1]          # 3 * Hp

    # ---- Hoisted input projections: ONE bf16 MXU matmul for all timesteps. ----
    # (T, TB, E) -> (T*TB, E) merges leading dims only (copy-free: TB % 8 == 0).
    x_all = emb_ref[...].reshape(T * TB, E)                       # bf16
    xi_ref[...] = (jnp.dot(x_all, wih_ref[...],
                           preferred_element_type=jnp.float32)
                   + bi_ref[...])                                 # (T*TB, 3Hp) f32
    # bi already contains b_ih + b_hh for the r/z gates and b_in for the n gate.

    b_hn = bhn_ref[...]                                           # (1, Hp) -> 1 vreg

    def step(t, h):
        off = pl.multiple_of(t * TB, TB)
        gi = xi_ref[pl.ds(off, TB), :]                            # (TB, 3Hp) precomputed
        gh = jnp.dot(h.astype(jnp.bfloat16), whh_ref[...],
                     preferred_element_type=jnp.float32)          # (TB, 3Hp)
        r = _sigmoid_eup(gi[:, :Hp] + gh[:, :Hp])
        z = _sigmoid_eup(gi[:, Hp:2 * Hp] + gh[:, Hp:2 * Hp])
        n = jnp.tanh(gi[:, 2 * Hp:] + r * (gh[:, 2 * Hp:] + b_hn))
        return (1.0 - z) * n + z * h                              # h stays in the carry (f32)

    unroll = True if T <= 16 else 8                               # avoid code/vreg blowup for long T
    h0 = jnp.zeros((TB, Hp), jnp.float32)
    h_t = lax.fori_loop(0, T, step, h0, unroll=unroll)

    # Final FC on the last hidden state; Np is a multiple of 128 -> lane-dense store.
    out_ref[...] = (jnp.dot(h_t.astype(jnp.bfloat16), wfc_ref[...],
                            preferred_element_type=jnp.float32) + bfc_ref[...])


def gru_rec_forward(seq, emb_table, w_ih, w_hh, b_ih, b_hh, w_fc, b_fc,
                    *, batch_block=128):
    B, T = seq.shape
    E = emb_table.shape[1]
    H = w_hh.shape[-1]
    N = w_fc.shape[-1]

    f32, bf16 = jnp.float32, jnp.bfloat16
    Hp = _round_up(H, 128)
    Np = _round_up(N, 128)
    H3 = 3 * Hp

    # --- batch tile: aim for >=2 grid iterations (both v7x TensorCores busy),
    #     cap at batch_block (128 saturates a 128-row MXU pass), keep TB % 8 == 0. ---
    Bp8 = _round_up(B, 8)
    if Bp8 >= 16:
        TB = min(batch_block, max(_round_up(Bp8 // 2, 8), 8))
    else:
        TB = Bp8
    # Keep the xi scratch under ~10 MiB so the kernel fits v5e's 16 MiB / v7x's
    # 32 MiB scoped-VMEM defaults without eviction.
    while T * TB * H3 * 4 > (10 << 20) and TB > 8:
        TB = max(_round_up(TB // 2, 8), 8)
    # TODO(synk): for very long T with TB already at 8, chunk the x-projection over
    # timesteps into a ring scratch instead of one (T*TB, 3Hp) buffer.
    Bp = _round_up(Bp8, TB)

    # --- fuse + zero-pad gate weights (bf16) --------------------------------
    def fuse_w(w, rows, rows_p):                       # (3, rows, H) -> (rows_p, 3Hp) bf16
        w = jnp.pad(w.astype(f32), ((0, 0), (0, rows_p - rows), (0, Hp - H)))
        return jnp.concatenate([w[0], w[1], w[2]], axis=1).astype(bf16)

    w_ih_f = fuse_w(w_ih, E, E)                        # (E,  3Hp)
    w_hh_f = fuse_w(w_hh, H, Hp)                       # (Hp, 3Hp)

    # --- biases: fold b_hh's r/z blocks into the x-side bias; keep b_hn apart ---
    b_rz = (b_ih[:2] + b_hh[:2]).astype(f32)           # (2, H): (b_ir+b_hr, b_iz+b_hz)
    b_in = b_ih[2:3].astype(f32)                       # (1, H): b_in only
    b_fused = jnp.concatenate([b_rz, b_in], axis=0)    # (3, H), gate order r, z, n
    b_fused = jnp.pad(b_fused, ((0, 0), (0, Hp - H))).reshape(1, H3)      # (1, 3Hp)
    b_hn = jnp.pad(b_hh[2:3].astype(f32), ((0, 0), (0, Hp - H)))          # (1, Hp)

    w_fc_p = jnp.pad(w_fc.astype(f32), ((0, Hp - H), (0, Np - N))).astype(bf16)   # (Hp, Np)
    b_fc_p = jnp.pad(b_fc.reshape(1, N).astype(f32), ((0, 0), (0, Np - N)))       # (1, Np)

    # --- embedding gather, time-major, bf16 (halves the batch-scaling DMA).
    #     Padded batch rows use item 0 (zero row); their hidden state evolves via
    #     biases but is discarded by the final out[:B] slice. ---
    seq_p = jnp.zeros((Bp, T), seq.dtype).at[:B].set(seq)
    emb_tm = jnp.take(emb_table.astype(bf16), seq_p.T, axis=0)            # (T, Bp, E)
    # TODO(synk): fuse the gather into the kernel via scalar-prefetched indices
    # (pl.Element row gather) to avoid materializing (T, Bp, E) in HBM.

    # --- VMEM budget: only raise the scoped limit when the default won't do ---
    xi_bytes = T * TB * H3 * 4
    emb_bytes = 2 * T * TB * E * 2
    w_bytes = 2 * (E * H3 + Hp * H3 + Hp * Np) * 2 + 2 * (H3 + Hp + Np) * 4
    out_bytes = 2 * TB * Np * 4
    est = xi_bytes + emb_bytes + w_bytes + out_bytes
    vmem_limit = min(int(est * 1.3) + (4 << 20), 48 << 20) if est > (12 << 20) else None

    grid = (Bp // TB,)
    out = pl.pallas_call(
        gru_fc_kernel,
        out_shape=jax.ShapeDtypeStruct((Bp, Np), f32),
        grid_spec=pltpu.PrefetchScalarGridSpec(
            num_scalar_prefetch=0,
            grid=grid,
            in_specs=[
                pl.BlockSpec((T, TB, E), lambda b: (0, b, 0)),   # activations: batch-tiled, bf16
                pl.BlockSpec((E, H3),   lambda b: (0, 0)),       # fused W_ih (bf16)
                pl.BlockSpec((Hp, H3),  lambda b: (0, 0)),       # fused W_hh (bf16)
                pl.BlockSpec((1, H3),   lambda b: (0, 0)),       # fused x-side bias (f32)
                pl.BlockSpec((1, Hp),   lambda b: (0, 0)),       # b_hn (f32)
                pl.BlockSpec((Hp, Np),  lambda b: (0, 0)),       # W_fc (bf16)
                pl.BlockSpec((1, Np),   lambda b: (0, 0)),       # b_fc (f32)
            ],
            out_specs=pl.BlockSpec((TB, Np), lambda b: (b, 0)),
            scratch_shapes=[pltpu.VMEM((T * TB, H3), f32)],      # precomputed x-projections
        ),
        compiler_params=pltpu.CompilerParams(
            dimension_semantics=("parallel",),                   # batch is megacore-parallel
            vmem_limit_bytes=vmem_limit),
    )(emb_tm, w_ih_f, w_hh_f, b_fused, b_hn, w_fc_p, b_fc_p)

    return out[:B, :N]


def gru_rec_reference(seq, emb_table, w_ih, w_hh, b_ih, b_hh, w_fc, b_fc):
    """Pure-JAX f32 reference matching torch.nn.GRU semantics."""
    H = w_hh.shape[-1]
    B = seq.shape[0]
    emb = jnp.take(emb_table, seq, axis=0)          # (B, T, E)
    xs = jnp.transpose(emb, (1, 0, 2))              # (T, B, E)

    def cell(h, x_t):
        i_r = x_t @ w_ih[0] + b_ih[0]
        i_z = x_t @ w_ih[1] + b_ih[1]
        i_n = x_t @ w_ih[2] + b_ih[2]
        h_r = h @ w_hh[0] + b_hh[0]
        h_z = h @ w_hh[1] + b_hh[1]
        h_n = h @ w_hh[2] + b_hh[2]
        r = jax.nn.sigmoid(i_r + h_r)
        z = jax.nn.sigmoid(i_z + h_z)
        n = jnp.tanh(i_n + r * h_n)
        return (1.0 - z) * n + z * h, None

    h0 = jnp.zeros((B, H), jnp.float32)
    h_T, _ = lax.scan(cell, h0, xs)
    return h_T @ w_fc + b_fc


if __name__ == "__main__":
    # Small shapes consistent with the module.
    num_items = 96
    embedding_dim = 32
    hidden_dim = 64
    B, T = 4, 8

    key = jax.random.PRNGKey(0)
    ks = jax.random.split(key, 8)

    # Deterministic synthetic parameters (not a checkpoint).
    emb_table = 0.1 * jax.random.normal(ks[0], (num_items, embedding_dim), jnp.float32)
    emb_table = emb_table.at[0].set(0.0)            # padding_idx=0
    w_ih = 0.1 * jax.random.normal(ks[1], (3, embedding_dim, hidden_dim), jnp.float32)
    w_hh = 0.1 * jax.random.normal(ks[2], (3, hidden_dim, hidden_dim), jnp.float32)
    b_ih = 0.1 * jax.random.normal(ks[3], (3, hidden_dim), jnp.float32)
    b_hh = 0.1 * jax.random.normal(ks[4], (3, hidden_dim), jnp.float32)
    w_fc = 0.1 * jax.random.normal(ks[5], (hidden_dim, num_items), jnp.float32)
    b_fc = 0.1 * jax.random.normal(ks[6], (1, num_items), jnp.float32)

    # Example input sequences (include some padding zeros).
    seq = jax.random.randint(ks[7], (B, T), 0, num_items, dtype=jnp.int32)
    seq = seq.at[:, 0].set(0)

    logits = gru_rec_forward(seq, emb_table, w_ih, w_hh, b_ih, b_hh, w_fc, b_fc)
    logits = jax.block_until_ready(logits)

    ref = gru_rec_reference(seq, emb_table, w_ih, w_hh, b_ih, b_hh, w_fc, b_fc)
    assert logits.shape == (B, num_items)
    # bf16 MXU operands + approx-reciprocal sigmoid vs. the f32 reference:
    # tolerance relaxed accordingly.
    assert jnp.allclose(logits, ref, atol=3e-2, rtol=3e-2), "mismatch vs JAX reference"

    print("KERNEL_OK")
</pallas_src>

<mosaic_0001>
module attributes {stable_mosaic.version = 11 : i64} {
  func.func @gru_fc_kernel(%arg0: i32, %arg1: memref<8x8x32xbf16, #tpu.memory_space<vmem>>, %arg2: memref<32x384xbf16, #tpu.memory_space<vmem>>, %arg3: memref<128x384xbf16, #tpu.memory_space<vmem>>, %arg4: memref<1x384xf32, #tpu.memory_space<vmem>>, %arg5: memref<1x128xf32, #tpu.memory_space<vmem>>, %arg6: memref<128x128xbf16, #tpu.memory_space<vmem>>, %arg7: memref<1x128xf32, #tpu.memory_space<vmem>>, %arg8: memref<8x128xf32, #tpu.memory_space<vmem>>, %arg9: memref<64x384xf32, #tpu.memory_space<vmem>>) attributes {dimension_semantics = [#tpu.dimension_semantics<parallel>], iteration_bounds = array<i64: 1>, scalar_prefetch = 0 : i64, scratch_operands = 1 : i64, tpu.core_type = #tpu.core_type<tc>, window_params = [{transform_indices = @transform_0, window_bounds = array<i64: 8, 8, 32>}, {pipeline_mode = #tpu.pipeline_mode<synchronous>, transform_indices = @transform_1, window_bounds = array<i64: 32, 384>}, {pipeline_mode = #tpu.pipeline_mode<synchronous>, transform_indices = @transform_2, window_bounds = array<i64: 128, 384>}, {pipeline_mode = #tpu.pipeline_mode<synchronous>, transform_indices = @transform_3, window_bounds = array<i64: 1, 384>}, {pipeline_mode = #tpu.pipeline_mode<synchronous>, transform_indices = @transform_4, window_bounds = array<i64: 1, 128>}, {pipeline_mode = #tpu.pipeline_mode<synchronous>, transform_indices = @transform_5, window_bounds = array<i64: 128, 128>}, {pipeline_mode = #tpu.pipeline_mode<synchronous>, transform_indices = @transform_6, window_bounds = array<i64: 1, 128>}, {transform_indices = @transform_7, window_bounds = array<i64: 8, 128>}]} {
    %c0 = arith.constant 0 : index
    %c0_0 = arith.constant 0 : index
    %c0_1 = arith.constant 0 : index
    %0 = vector.load %arg1[%c0, %c0_0, %c0_1] : memref<8x8x32xbf16, #tpu.memory_space<vmem>>, vector<8x8x32xbf16>
    %1 = vector.shape_cast %0 : vector<8x8x32xbf16> to vector<64x32xbf16>
    %c0_2 = arith.constant 0 : index
    %c0_3 = arith.constant 0 : index
    %2 = vector.load %arg2[%c0_2, %c0_3] : memref<32x384xbf16, #tpu.memory_space<vmem>>, vector<32x384xbf16>
    %cst = arith.constant dense<0.000000e+00> : vector<64x384xf32>
    %3 = tpu.matmul %1, %2, %cst {dimension_numbers = #tpu.dot_dimension_numbers<[1], [0], [0], [1], [0, 0, 1, 1], [], []>} : vector<64x32xbf16>, vector<32x384xbf16>, vector<64x384xf32> -> vector<64x384xf32>
    %c0_4 = arith.constant 0 : index
    %c0_5 = arith.constant 0 : index
    %4 = vector.load %arg4[%c0_4, %c0_5] : memref<1x384xf32, #tpu.memory_space<vmem>>, vector<1x384xf32>
    %5 = vector.broadcast %4 : vector<1x384xf32> to vector<64x384xf32>
    %6 = arith.addf %3, %5 : vector<64x384xf32>
    %c0_6 = arith.constant 0 : index
    %c0_7 = arith.constant 0 : index
    %7 = vector.load %arg9[%c0_6, %c0_7] : memref<64x384xf32, #tpu.memory_space<vmem>>, vector<64x384xf32>
    tpu.vector_store %arg9[%c0_6, %c0_7], %6 {strides = array<i32>} : memref<64x384xf32, #tpu.memory_space<vmem>>, vector<64x384xf32>,
    %c0_8 = arith.constant 0 : index
    %c0_9 = arith.constant 0 : index
    %8 = vector.load %arg5[%c0_8, %c0_9] : memref<1x128xf32, #tpu.memory_space<vmem>>, vector<1x128xf32>
    %cst_10 = arith.constant 0.000000e+00 : f32
    %9 = vector.broadcast %cst_10 : f32 to vector<8x128xf32>
    %c0_i32 = arith.constant 0 : i32
    %c8_i32 = arith.constant 8 : i32
    %10 = arith.muli %c0_i32, %c8_i32 : i32
    %11 = tpu.assume_multiple %10, 8 : i32
    %12 = arith.index_cast %11 : i32 to index
    %c0_11 = arith.constant 0 : index
    %13 = vector.load %arg9[%12, %c0_11] : memref<64x384xf32, #tpu.memory_space<vmem>>, vector<8x384xf32>
    %14 = arith.truncf %9 : vector<8x128xf32> to vector<8x128xbf16>
    %c0_12 = arith.constant 0 : index
    %c0_13 = arith.constant 0 : index
    %15 = vector.load %arg3[%c0_12, %c0_13] : memref<128x384xbf16, #tpu.memory_space<vmem>>, vector<128x384xbf16>
    %cst_14 = arith.constant dense<0.000000e+00> : vector<8x384xf32>
    %16 = tpu.matmul %14, %15, %cst_14 {dimension_numbers = #tpu.dot_dimension_numbers<[1], [0], [0], [1], [0, 0, 1, 1], [], []>} : vector<8x128xbf16>, vector<128x384xbf16>, vector<8x384xf32> -> vector<8x384xf32>
    %17 = vector.extract_strided_slice %13 {offsets = [0, 0], sizes = [8, 128], strides = [1, 1]} : vector<8x384xf32> to vector<8x128xf32>
    %18 = vector.extract_strided_slice %16 {offsets = [0, 0], sizes = [8, 128], strides = [1, 1]} : vector<8x384xf32> to vector<8x128xf32>
    %19 = arith.addf %17, %18 : vector<8x128xf32>
    %cst_15 = arith.constant 0.000000e+00 : f32
    %20 = vector.broadcast %cst_15 : f32 to vector<8x128xf32>
    %21 = arith.subf %20, %19 : vector<8x128xf32>
    %22 = math.exp %21 : vector<8x128xf32>
    %cst_16 = arith.constant 1.000000e+00 : f32
    %23 = vector.broadcast %cst_16 : f32 to vector<8x128xf32>
    %24 = arith.addf %23, %22 : vector<8x128xf32>
    %25 = tpu.reciprocal %24 {approx = true} : vector<8x128xf32> -> vector<8x128xf32>
    %26 = vector.extract_strided_slice %13 {offsets = [0, 128], sizes = [8, 128], strides = [1, 1]} : vector<8x384xf32> to vector<8x128xf32>
    %27 = vector.extract_strided_slice %16 {offsets = [0, 128], sizes = [8, 128], strides = [1, 1]} : vector<8x384xf32> to vector<8x128xf32>
    %28 = arith.addf %26, %27 : vector<8x128xf32>
    %cst_17 = arith.constant 0.000000e+00 : f32
    %29 = vector.broadcast %cst_17 : f32 to vector<8x128xf32>
    %30 = arith.subf %29, %28 : vector<8x128xf32>
    %31 = math.exp %30 : vector<8x128xf32>
    %cst_18 = arith.constant 1.000000e+00 : f32
    %32 = vector.broadcast %cst_18 : f32 to vector<8x128xf32>
    %33 = arith.addf %32, %31 : vector<8x128xf32>
    %34 = tpu.reciprocal %33 {approx = true} : vector<8x128xf32> -> vector<8x128xf32>
    %35 = vector.extract_strided_slice %13 {offsets = [0, 256], sizes = [8, 128], strides = [1, 1]} : vector<8x384xf32> to vector<8x128xf32>
    %36 = vector.extract_strided_slice %16 {offsets = [0, 256], sizes = [8, 128], strides = [1, 1]} : vector<8x384xf32> to vector<8x128xf32>
    %37 = vector.broadcast %8 : vector<1x128xf32> to vector<8x128xf32>
    %38 = arith.addf %36, %37 : vector<8x128xf32>
    %39 = arith.mulf %25, %38 : vector<8x128xf32>
    %40 = arith.addf %35, %39 : vector<8x128xf32>
    %41 = math.tanh %40 : vector<8x128xf32>
    %cst_19 = arith.constant 1.000000e+00 : f32
    %42 = vector.broadcast %cst_19 : f32 to vector<8x128xf32>
    %43 = arith.subf %42, %34 : vector<8x128xf32>
    %44 = arith.mulf %43, %41 : vector<8x128xf32>
    %45 = arith.mulf %34, %9 : vector<8x128xf32>
    %46 = arith.addf %44, %45 : vector<8x128xf32>
    %c1_i32 = arith.constant 1 : i32
    %c8_i32_20 = arith.constant 8 : i32
    %47 = arith.muli %c1_i32, %c8_i32_20 : i32
    %48 = tpu.assume_multiple %47, 8 : i32
    %49 = arith.index_cast %48 : i32 to index
    %c0_21 = arith.constant 0 : index
    %50 = vector.load %arg9[%49, %c0_21] : memref<64x384xf32, #tpu.memory_space<vmem>>, vector<8x384xf32>
    %51 = arith.truncf %46 : vector<8x128xf32> to vector<8x128xbf16>
    %c0_22 = arith.constant 0 : index
    %c0_23 = arith.constant 0 : index
    %52 = vector.load %arg3[%c0_22, %c0_23] : memref<128x384xbf16, #tpu.memory_space<vmem>>, vector<128x384xbf16>
    %cst_24 = arith.constant dense<0.000000e+00> : vector<8x384xf32>
    %53 = tpu.matmul %51, %52, %cst_24 {dimension_numbers = #tpu.dot_dimension_numbers<[1], [0], [0], [1], [0, 0, 1, 1], [], []>} : vector<8x128xbf16>, vector<128x384xbf16>, vector<8x384xf32> -> vector<8x384xf32>
    %54 = vector.extract_strided_slice %50 {offsets = [0, 0], sizes = [8, 128], strides = [1, 1]} : vector<8x384xf32> to vector<8x128xf32>
    %55 = vector.extract_strided_slice %53 {offsets = [0, 0], sizes = [8, 128], strides = [1, 1]} : vector<8x384xf32> to vector<8x128xf32>
    %56 = arith.addf %54, %55 : vector<8x128xf32>
    %cst_25 = arith.constant 0.000000e+00 : f32
    %57 = vector.broadcast %cst_25 : f32 to vector<8x128xf32>
    %58 = arith.subf %57, %56 : vector<8x128xf32>
    %59 = math.exp %58 : vector<8x128xf32>
    %cst_26 = arith.constant 1.000000e+00 : f32
    %60 = vector.broadcast %cst_26 : f32 to vector<8x128xf32>
    %61 = arith.addf %60, %59 : vector<8x128xf32>
    %62 = tpu.reciprocal %61 {approx = true} : vector<8x128xf32> -> vector<8x128xf32>
    %63 = vector.extract_strided_slice %50 {offsets = [0, 128], sizes = [8, 128], strides = [1, 1]} : vector<8x384xf32> to vector<8x128xf32>
    %64 = vector.extract_strided_slice %53 {offsets = [0, 128], sizes = [8, 128], strides = [1, 1]} : vector<8x384xf32> to vector<8x128xf32>
    %65 = arith.addf %63, %64 : vector<8x128xf32>
    %cst_27 = arith.constant 0.000000e+00 : f32
    %66 = vector.broadcast %cst_27 : f32 to vector<8x128xf32>
    %67 = arith.subf %66, %65 : vector<8x128xf32>
    %68 = math.exp %67 : vector<8x128xf32>
    %cst_28 = arith.constant 1.000000e+00 : f32
    %69 = vector.broadcast %cst_28 : f32 to vector<8x128xf32>
    %70 = arith.addf %69, %68 : vector<8x128xf32>
    %71 = tpu.reciprocal %70 {approx = true} : vector<8x128xf32> -> vector<8x128xf32>
    %72 = vector.extract_strided_slice %50 {offsets = [0, 256], sizes = [8, 128], strides = [1, 1]} : vector<8x384xf32> to vector<8x128xf32>
    %73 = vector.extract_strided_slice %53 {offsets = [0, 256], sizes = [8, 128], strides = [1, 1]} : vector<8x384xf32> to vector<8x128xf32>
    %74 = vector.broadcast %8 : vector<1x128xf32> to vector<8x128xf32>
    %75 = arith.addf %73, %74 : vector<8x128xf32>
    %76 = arith.mulf %62, %75 : vector<8x128xf32>
    %77 = arith.addf %72, %76 : vector<8x128xf32>
    %78 = math.tanh %77 : vector<8x128xf32>
    %cst_29 = arith.constant 1.000000e+00 : f32
    %79 = vector.broadcast %cst_29 : f32 to vector<8x128xf32>
    %80 = arith.subf %79, %71 : vector<8x128xf32>
    %81 = arith.mulf %80, %78 : vector<8x128xf32>
    %82 = arith.mulf %71, %46 : vector<8x128xf32>
    %83 = arith.addf %81, %82 : vector<8x128xf32>
    %c2_i32 = arith.constant 2 : i32
    %c8_i32_30 = arith.constant 8 : i32
    %84 = arith.muli %c2_i32, %c8_i32_30 : i32
    %85 = tpu.assume_multiple %84, 8 : i32
    %86 = arith.index_cast %85 : i32 to index
    %c0_31 = arith.constant 0 : index
    %87 = vector.load %arg9[%86, %c0_31] : memref<64x384xf32, #tpu.memory_space<vmem>>, vector<8x384xf32>
    %88 = arith.truncf %83 : vector<8x128xf32> to vector<8x128xbf16>
    %c0_32 = arith.constant 0 : index
    %c0_33 = arith.constant 0 : index
    %89 = vector.load %arg3[%c0_32, %c0_33] : memref<128x384xbf16, #tpu.memory_space<vmem>>, vector<128x384xbf16>
    %cst_34 = arith.constant dense<0.000000e+00> : vector<8x384xf32>
    %90 = tpu.matmul %88, %89, %cst_34 {dimension_numbers = #tpu.dot_dimension_numbers<[1], [0], [0], [1], [0, 0, 1, 1], [], []>} : vector<8x128xbf16>, vector<128x384xbf16>, vector<8x384xf32> -> vector<8x384xf32>
    %91 = vector.extract_strided_slice %87 {offsets = [0, 0], sizes = [8, 128], strides = [1, 1]} : vector<8x384xf32> to vector<8x128xf32>
    %92 = vector.extract_strided_slice %90 {offsets = [0, 0], sizes = [8, 128], strides = [1, 1]} : vector<8x384xf32> to vector<8x128xf32>
    %93 = arith.addf %91, %92 : vector<8x128xf32>
    %cst_35 = arith.constant 0.000000e+00 : f32
    %94 = vector.broadcast %cst_35 : f32 to vector<8x128xf32>
    %95 = arith.subf %94, %93 : vector<8x128xf32>
    %96 = math.exp %95 : vector<8x128xf32>
    %cst_36 = arith.constant 1.000000e+00 : f32
    %97 = vector.broadcast %cst_36 : f32 to vector<8x128xf32>
    %98 = arith.addf %97, %96 : vector<8x128xf32>
    %99 = tpu.reciprocal %98 {approx = true} : vector<8x128xf32> -> vector<8x128xf32>
    %100 = vector.extract_strided_slice %87 {offsets = [0, 128], sizes = [8, 128], strides = [1, 1]} : vector<8x384xf32> to vector<8x128xf32>
    %101 = vector.extract_strided_slice %90 {offsets = [0, 128], sizes = [8, 128], strides = [1, 1]} : vector<8x384xf32> to vector<8x128xf32>
    %102 = arith.addf %100, %101 : vector<8x128xf32>
    %cst_37 = arith.constant 0.000000e+00 : f32
    %103 = vector.broadcast %cst_37 : f32 to vector<8x128xf32>
    %104 = arith.subf %103, %102 : vector<8x128xf32>
    %105 = math.exp %104 : vector<8x128xf32>
    %cst_38 = arith.constant 1.000000e+00 : f32
    %106 = vector.broadcast %cst_38 : f32 to vector<8x128xf32>
    %107 = arith.addf %106, %105 : vector<8x128xf32>
    %108 = tpu.reciprocal %107 {approx = true} : vector<8x128xf32> -> vector<8x128xf32>
    %109 = vector.extract_strided_slice %87 {offsets = [0, 256], sizes = [8, 128], strides = [1, 1]} : vector<8x384xf32> to vector<8x128xf32>
    %110 = vector.extract_strided_slice %90 {offsets = [0, 256], sizes = [8, 128], strides = [1, 1]} : vector<8x384xf32> to vector<8x128xf32>
    %111 = vector.broadcast %8 : vector<1x128xf32> to vector<8x128xf32>
    %112 = arith.addf %110, %111 : vector<8x128xf32>
    %113 = arith.mulf %99, %112 : vector<8x128xf32>
    %114 = arith.addf %109, %113 : vector<8x128xf32>
    %115 = math.tanh %114 : vector<8x128xf32>
    %cst_39 = arith.constant 1.000000e+00 : f32
    %116 = vector.broadcast %cst_39 : f32 to vector<8x128xf32>
    %117 = arith.subf %116, %108 : vector<8x128xf32>
    %118 = arith.mulf %117, %115 : vector<8x128xf32>
    %119 = arith.mulf %108, %83 : vector<8x128xf32>
    %120 = arith.addf %118, %119 : vector<8x128xf32>
    %c3_i32 = arith.constant 3 : i32
    %c8_i32_40 = arith.constant 8 : i32
    %121 = arith.muli %c3_i32, %c8_i32_40 : i32
    %122 = tpu.assume_multiple %121, 8 : i32
    %123 = arith.index_cast %122 : i32 to index
    %c0_41 = arith.constant 0 : index
    %124 = vector.load %arg9[%123, %c0_41] : memref<64x384xf32, #tpu.memory_space<vmem>>, vector<8x384xf32>
    %125 = arith.truncf %120 : vector<8x128xf32> to vector<8x128xbf16>
    %c0_42 = arith.constant 0 : index
    %c0_43 = arith.constant 0 : index
    %126 = vector.load %arg3[%c0_42, %c0_43] : memref<128x384xbf16, #tpu.memory_space<vmem>>, vector<128x384xbf16>
    %cst_44 = arith.constant dense<0.000000e+00> : vector<8x384xf32>
    %127 = tpu.matmul %125, %126, %cst_44 {dimension_numbers = #tpu.dot_dimension_numbers<[1], [0], [0], [1], [0, 0, 1, 1], [], []>} : vector<8x128xbf16>, vector<128x384xbf16>, vector<8x384xf32> -> vector<8x384xf32>
    %128 = vector.extract_strided_slice %124 {offsets = [0, 0], sizes = [8, 128], strides = [1, 1]} : vector<8x384xf32> to vector<8x128xf32>
    %129 = vector.extract_strided_slice %127 {offsets = [0, 0], sizes = [8, 128], strides = [1, 1]} : vector<8x384xf32> to vector<8x128xf32>
    %130 = arith.addf %128, %129 : vector<8x128xf32>
    %cst_45 = arith.constant 0.000000e+00 : f32
    %131 = vector.broadcast %cst_45 : f32 to vector<8x128xf32>
    %132 = arith.subf %131, %130 : vector<8x128xf32>
    %133 = math.exp %132 : vector<8x128xf32>
    %cst_46 = arith.constant 1.000000e+00 : f32
    %134 = vector.broadcast %cst_46 : f32 to vector<8x128xf32>
    %135 = arith.addf %134, %133 : vector<8x128xf32>
    %136 = tpu.reciprocal %135 {approx = true} : vector<8x128xf32> -> vector<8x128xf32>
    %137 = vector.extract_strided_slice %124 {offsets = [0, 128], sizes = [8, 128], strides = [1, 1]} : vector<8x384xf32> to vector<8x128xf32>
    %138 = vector.extract_strided_slice %127 {offsets = [0, 128], sizes = [8, 128], strides = [1, 1]} : vector<8x384xf32> to vector<8x128xf32>
    %139 = arith.addf %137, %138 : vector<8x128xf32>
    %cst_47 = arith.constant 0.000000e+00 : f32
    %140 = vector.broadcast %cst_47 : f32 to vector<8x128xf32>
    %141 = arith.subf %140, %139 : vector<8x128xf32>
    %142 = math.exp %141 : vector<8x128xf32>
    %cst_48 = arith.constant 1.000000e+00 : f32
    %143 = vector.broadcast %cst_48 : f32 to vector<8x128xf32>
    %144 = arith.addf %143, %142 : vector<8x128xf32>
    %145 = tpu.reciprocal %144 {approx = true} : vector<8x128xf32> -> vector<8x128xf32>
    %146 = vector.extract_strided_slice %124 {offsets = [0, 256], sizes = [8, 128], strides = [1, 1]} : vector<8x384xf32> to vector<8x128xf32>
    %147 = vector.extract_strided_slice %127 {offsets = [0, 256], sizes = [8, 128], strides = [1, 1]} : vector<8x384xf32> to vector<8x128xf32>
    %148 = vector.broadcast %8 : vector<1x128xf32> to vector<8x128xf32>
    %149 = arith.addf %147, %148 : vector<8x128xf32>
    %150 = arith.mulf %136, %149 : vector<8x128xf32>
    %151 = arith.addf %146, %150 : vector<8x128xf32>
    %152 = math.tanh %151 : vector<8x128xf32>
    %cst_49 = arith.constant 1.000000e+00 : f32
    %153 = vector.broadcast %cst_49 : f32 to vector<8x128xf32>
    %154 = arith.subf %153, %145 : vector<8x128xf32>
    %155 = arith.mulf %154, %152 : vector<8x128xf32>
    %156 = arith.mulf %145, %120 : vector<8x128xf32>
    %157 = arith.addf %155, %156 : vector<8x128xf32>
    %c4_i32 = arith.constant 4 : i32
    %c8_i32_50 = arith.constant 8 : i32
    %158 = arith.muli %c4_i32, %c8_i32_50 : i32
    %159 = tpu.assume_multiple %158, 8 : i32
    %160 = arith.index_cast %159 : i32 to index
    %c0_51 = arith.constant 0 : index
    %161 = vector.load %arg9[%160, %c0_51] : memref<64x384xf32, #tpu.memory_space<vmem>>, vector<8x384xf32>
    %162 = arith.truncf %157 : vector<8x128xf32> to vector<8x128xbf16>
    %c0_52 = arith.constant 0 : index
    %c0_53 = arith.constant 0 : index
    %163 = vector.load %arg3[%c0_52, %c0_53] : memref<128x384xbf16, #tpu.memory_space<vmem>>, vector<128x384xbf16>
    %cst_54 = arith.constant dense<0.000000e+00> : vector<8x384xf32>
    %164 = tpu.matmul %162, %163, %cst_54 {dimension_numbers = #tpu.dot_dimension_numbers<[1], [0], [0], [1], [0, 0, 1, 1], [], []>} : vector<8x128xbf16>, vector<128x384xbf16>, vector<8x384xf32> -> vector<8x384xf32>
    %165 = vector.extract_strided_slice %161 {offsets = [0, 0], sizes = [8, 128], strides = [1, 1]} : vector<8x384xf32> to vector<8x128xf32>
    %166 = vector.extract_strided_slice %164 {offsets = [0, 0], sizes = [8, 128], strides = [1, 1]} : vector<8x384xf32> to vector<8x128xf32>
    %167 = arith.addf %165, %166 : vector<8x128xf32>
    %cst_55 = arith.constant 0.000000e+00 : f32
    %168 = vector.broadcast %cst_55 : f32 to vector<8x128xf32>
    %169 = arith.subf %168, %167 : vector<8x128xf32>
    %170 = math.exp %169 : vector<8x128xf32>
    %cst_56 = arith.constant 1.000000e+00 : f32
    %171 = vector.broadcast %cst_56 : f32 to vector<8x128xf32>
    %172 = arith.addf %171, %170 : vector<8x128xf32>
    %173 = tpu.reciprocal %172 {approx = true} : vector<8x128xf32> -> vector<8x128xf32>
    %174 = vector.extract_strided_slice %161 {offsets = [0, 128], sizes = [8, 128], strides = [1, 1]} : vector<8x384xf32> to vector<8x128xf32>
    %175 = vector.extract_strided_slice %164 {offsets = [0, 128], sizes = [8, 128], strides = [1, 1]} : vector<8x384xf32> to vector<8x128xf32>
    %176 = arith.addf %174, %175 : vector<8x128xf32>
    %cst_57 = arith.constant 0.000000e+00 : f32
    %177 = vector.broadcast %cst_57 : f32 to vector<8x128xf32>
    %178 = arith.subf %177, %176 : vector<8x128xf32>
    %179 = math.exp %178 : vector<8x128xf32>
    %cst_58 = arith.constant 1.000000e+00 : f32
    %180 = vector.broadcast %cst_58 : f32 to vector<8x128xf32>
    %181 = arith.addf %180, %179 : vector<8x128xf32>
    %182 = tpu.reciprocal %181 {approx = true} : vector<8x128xf32> -> vector<8x128xf32>
    %183 = vector.extract_strided_slice %161 {offsets = [0, 256], sizes = [8, 128], strides = [1, 1]} : vector<8x384xf32> to vector<8x128xf32>
    %184 = vector.extract_strided_slice %164 {offsets = [0, 256], sizes = [8, 128], strides = [1, 1]} : vector<8x384xf32> to vector<8x128xf32>
    %185 = vector.broadcast %8 : vector<1x128xf32> to vector<8x128xf32>
    %186 = arith.addf %184, %185 : vector<8x128xf32>
    %187 = arith.mulf %173, %186 : vector<8x128xf32>
    %188 = arith.addf %183, %187 : vector<8x128xf32>
    %189 = math.tanh %188 : vector<8x128xf32>
    %cst_59 = arith.constant 1.000000e+00 : f32
    %190 = vector.broadcast %cst_59 : f32 to vector<8x128xf32>
    %191 = arith.subf %190, %182 : vector<8x128xf32>
    %192 = arith.mulf %191, %189 : vector<8x128xf32>
    %193 = arith.mulf %182, %157 : vector<8x128xf32>
    %194 = arith.addf %192, %193 : vector<8x128xf32>
    %c5_i32 = arith.constant 5 : i32
    %c8_i32_60 = arith.constant 8 : i32
    %195 = arith.muli %c5_i32, %c8_i32_60 : i32
    %196 = tpu.assume_multiple %195, 8 : i32
    %197 = arith.index_cast %196 : i32 to index
    %c0_61 = arith.constant 0 : index
    %198 = vector.load %arg9[%197, %c0_61] : memref<64x384xf32, #tpu.memory_space<vmem>>, vector<8x384xf32>
    %199 = arith.truncf %194 : vector<8x128xf32> to vector<8x128xbf16>
    %c0_62 = arith.constant 0 : index
    %c0_63 = arith.constant 0 : index
    %200 = vector.load %arg3[%c0_62, %c0_63] : memref<128x384xbf16, #tpu.memory_space<vmem>>, vector<128x384xbf16>
    %cst_64 = arith.constant dense<0.000000e+00> : vector<8x384xf32>
    %201 = tpu.matmul %199, %200, %cst_64 {dimension_numbers = #tpu.dot_dimension_numbers<[1], [0], [0], [1], [0, 0, 1, 1], [], []>} : vector<8x128xbf16>, vector<128x384xbf16>, vector<8x384xf32> -> vector<8x384xf32>
    %202 = vector.extract_strided_slice %198 {offsets = [0, 0], sizes = [8, 128], strides = [1, 1]} : vector<8x384xf32> to vector<8x128xf32>
    %203 = vector.extract_strided_slice %201 {offsets = [0, 0], sizes = [8, 128], strides = [1, 1]} : vector<8x384xf32> to vector<8x128xf32>
    %204 = arith.addf %202, %203 : vector<8x128xf32>
    %cst_65 = arith.constant 0.000000e+00 : f32
    %205 = vector.broadcast %cst_65 : f32 to vector<8x128xf32>
    %206 = arith.subf %205, %204 : vector<8x128xf32>
    %207 = math.exp %206 : vector<8x128xf32>
    %cst_66 = arith.constant 1.000000e+00 : f32
    %208 = vector.broadcast %cst_66 : f32 to vector<8x128xf32>
    %209 = arith.addf %208, %207 : vector<8x128xf32>
    %210 = tpu.reciprocal %209 {approx = true} : vector<8x128xf32> -> vector<8x128xf32>
    %211 = vector.extract_strided_slice %198 {offsets = [0, 128], sizes = [8, 128], strides = [1, 1]} : vector<8x384xf32> to vector<8x128xf32>
    %212 = vector.extract_strided_slice %201 {offsets = [0, 128], sizes = [8, 128], strides = [1, 1]} : vector<8x384xf32> to vector<8x128xf32>
    %213 = arith.addf %211, %212 : vector<8x128xf32>
    %cst_67 = arith.constant 0.000000e+00 : f32
    %214 = vector.broadcast %cst_67 : f32 to vector<8x128xf32>
    %215 = arith.subf %214, %213 : vector<8x128xf32>
    %216 = math.exp %215 : vector<8x128xf32>
    %cst_68 = arith.constant 1.000000e+00 : f32
    %217 = vector.broadcast %cst_68 : f32 to vector<8x128xf32>
    %218 = arith.addf %217, %216 : vector<8x128xf32>
    %219 = tpu.reciprocal %218 {approx = true} : vector<8x128xf32> -> vector<8x128xf32>
    %220 = vector.extract_strided_slice %198 {offsets = [0, 256], sizes = [8, 128], strides = [1, 1]} : vector<8x384xf32> to vector<8x128xf32>
    %221 = vector.extract_strided_slice %201 {offsets = [0, 256], sizes = [8, 128], strides = [1, 1]} : vector<8x384xf32> to vector<8x128xf32>
    %222 = vector.broadcast %8 : vector<1x128xf32> to vector<8x128xf32>
    %223 = arith.addf %221, %222 : vector<8x128xf32>
    %224 = arith.mulf %210, %223 : vector<8x128xf32>
    %225 = arith.addf %220, %224 : vector<8x128xf32>
    %226 = math.tanh %225 : vector<8x128xf32>
    %cst_69 = arith.constant 1.000000e+00 : f32
    %227 = vector.broadcast %cst_69 : f32 to vector<8x128xf32>
    %228 = arith.subf %227, %219 : vector<8x128xf32>
    %229 = arith.mulf %228, %226 : vector<8x128xf32>
    %230 = arith.mulf %219, %194 : vector<8x128xf32>
    %231 = arith.addf %229, %230 : vector<8x128xf32>
    %c6_i32 = arith.constant 6 : i32
    %c8_i32_70 = arith.constant 8 : i32
    %232 = arith.muli %c6_i32, %c8_i32_70 : i32
    %233 = tpu.assume_multiple %232, 8 : i32
    %234 = arith.index_cast %233 : i32 to index
    %c0_71 = arith.constant 0 : index
    %235 = vector.load %arg9[%234, %c0_71] : memref<64x384xf32, #tpu.memory_space<vmem>>, vector<8x384xf32>
    %236 = arith.truncf %231 : vector<8x128xf32> to vector<8x128xbf16>
    %c0_72 = arith.constant 0 : index
    %c0_73 = arith.constant 0 : index
    %237 = vector.load %arg3[%c0_72, %c0_73] : memref<128x384xbf16, #tpu.memory_space<vmem>>, vector<128x384xbf16>
    %cst_74 = arith.constant dense<0.000000e+00> : vector<8x384xf32>
    %238 = tpu.matmul %236, %237, %cst_74 {dimension_numbers = #tpu.dot_dimension_numbers<[1], [0], [0], [1], [0, 0, 1, 1], [], []>} : vector<8x128xbf16>, vector<128x384xbf16>, vector<8x384xf32> -> vector<8x384xf32>
    %239 = vector.extract_strided_slice %235 {offsets = [0, 0], sizes = [8, 128], strides = [1, 1]} : vector<8x384xf32> to vector<8x128xf32>
    %240 = vector.extract_strided_slice %238 {offsets = [0, 0], sizes = [8, 128], strides = [1, 1]} : vector<8x384xf32> to vector<8x128xf32>
    %241 = arith.addf %239, %240 : vector<8x128xf32>
    %cst_75 = arith.constant 0.000000e+00 : f32
    %242 = vector.broadcast %cst_75 : f32 to vector<8x128xf32>
    %243 = arith.subf %242, %241 : vector<8x128xf32>
    %244 = math.exp %243 : vector<8x128xf32>
    %cst_76 = arith.constant 1.000000e+00 : f32
    %245 = vector.broadcast %cst_76 : f32 to vector<8x128xf32>
    %246 = arith.addf %245, %244 : vector<8x128xf32>
    %247 = tpu.reciprocal %246 {approx = true} : vector<8x128xf32> -> vector<8x128xf32>
    %248 = vector.extract_strided_slice %235 {offsets = [0, 128], sizes = [8, 128], strides = [1, 1]} : vector<8x384xf32> to vector<8x128xf32>
    %249 = vector.extract_strided_slice %238 {offsets = [0, 128], sizes = [8, 128], strides = [1, 1]} : vector<8x384xf32> to vector<8x128xf32>
    %250 = arith.addf %248, %249 : vector<8x128xf32>
    %cst_77 = arith.constant 0.000000e+00 : f32
    %251 = vector.broadcast %cst_77 : f32 to vector<8x128xf32>
    %252 = arith.subf %251, %250 : vector<8x128xf32>
    %253 = math.exp %252 : vector<8x128xf32>
    %cst_78 = arith.constant 1.000000e+00 : f32
    %254 = vector.broadcast %cst_78 : f32 to vector<8x128xf32>
    %255 = arith.addf %254, %253 : vector<8x128xf32>
    %256 = tpu.reciprocal %255 {approx = true} : vector<8x128xf32> -> vector<8x128xf32>
    %257 = vector.extract_strided_slice %235 {offsets = [0, 256], sizes = [8, 128], strides = [1, 1]} : vector<8x384xf32> to vector<8x128xf32>
    %258 = vector.extract_strided_slice %238 {offsets = [0, 256], sizes = [8, 128], strides = [1, 1]} : vector<8x384xf32> to vector<8x128xf32>
    %259 = vector.broadcast %8 : vector<1x128xf32> to vector<8x128xf32>
    %260 = arith.addf %258, %259 : vector<8x128xf32>
    %261 = arith.mulf %247, %260 : vector<8x128xf32>
    %262 = arith.addf %257, %261 : vector<8x128xf32>
    %263 = math.tanh %262 : vector<8x128xf32>
    %cst_79 = arith.constant 1.000000e+00 : f32
    %264 = vector.broadcast %cst_79 : f32 to vector<8x128xf32>
    %265 = arith.subf %264, %256 : vector<8x128xf32>
    %266 = arith.mulf %265, %263 : vector<8x128xf32>
    %267 = arith.mulf %256, %231 : vector<8x128xf32>
    %268 = arith.addf %266, %267 : vector<8x128xf32>
    %c7_i32 = arith.constant 7 : i32
    %c8_i32_80 = arith.constant 8 : i32
    %269 = arith.muli %c7_i32, %c8_i32_80 : i32
    %270 = tpu.assume_multiple %269, 8 : i32
    %271 = arith.index_cast %270 : i32 to index
    %c0_81 = arith.constant 0 : index
    %272 = vector.load %arg9[%271, %c0_81] : memref<64x384xf32, #tpu.memory_space<vmem>>, vector<8x384xf32>
    %273 = arith.truncf %268 : vector<8x128xf32> to vector<8x128xbf16>
    %c0_82 = arith.constant 0 : index
    %c0_83 = arith.constant 0 : index
    %274 = vector.load %arg3[%c0_82, %c0_83] : memref<128x384xbf16, #tpu.memory_space<vmem>>, vector<128x384xbf16>
    %cst_84 = arith.constant dense<0.000000e+00> : vector<8x384xf32>
    %275 = tpu.matmul %273, %274, %cst_84 {dimension_numbers = #tpu.dot_dimension_numbers<[1], [0], [0], [1], [0, 0, 1, 1], [], []>} : vector<8x128xbf16>, vector<128x384xbf16>, vector<8x384xf32> -> vector<8x384xf32>
    %276 = vector.extract_strided_slice %272 {offsets = [0, 0], sizes = [8, 128], strides = [1, 1]} : vector<8x384xf32> to vector<8x128xf32>
    %277 = vector.extract_strided_slice %275 {offsets = [0, 0], sizes = [8, 128], strides = [1, 1]} : vector<8x384xf32> to vector<8x128xf32>
    %278 = arith.addf %276, %277 : vector<8x128xf32>
    %cst_85 = arith.constant 0.000000e+00 : f32
    %279 = vector.broadcast %cst_85 : f32 to vector<8x128xf32>
    %280 = arith.subf %279, %278 : vector<8x128xf32>
    %281 = math.exp %280 : vector<8x128xf32>
    %cst_86 = arith.constant 1.000000e+00 : f32
    %282 = vector.broadcast %cst_86 : f32 to vector<8x128xf32>
    %283 = arith.addf %282, %281 : vector<8x128xf32>
    %284 = tpu.reciprocal %283 {approx = true} : vector<8x128xf32> -> vector<8x128xf32>
    %285 = vector.extract_strided_slice %272 {offsets = [0, 128], sizes = [8, 128], strides = [1, 1]} : vector<8x384xf32> to vector<8x128xf32>
    %286 = vector.extract_strided_slice %275 {offsets = [0, 128], sizes = [8, 128], strides = [1, 1]} : vector<8x384xf32> to vector<8x128xf32>
    %287 = arith.addf %285, %286 : vector<8x128xf32>
    %cst_87 = arith.constant 0.000000e+00 : f32
    %288 = vector.broadcast %cst_87 : f32 to vector<8x128xf32>
    %289 = arith.subf %288, %287 : vector<8x128xf32>
    %290 = math.exp %289 : vector<8x128xf32>
    %cst_88 = arith.constant 1.000000e+00 : f32
    %291 = vector.broadcast %cst_88 : f32 to vector<8x128xf32>
    %292 = arith.addf %291, %290 : vector<8x128xf32>
    %293 = tpu.reciprocal %292 {approx = true} : vector<8x128xf32> -> vector<8x128xf32>
    %294 = vector.extract_strided_slice %272 {offsets = [0, 256], sizes = [8, 128], strides = [1, 1]} : vector<8x384xf32> to vector<8x128xf32>
    %295 = vector.extract_strided_slice %275 {offsets = [0, 256], sizes = [8, 128], strides = [1, 1]} : vector<8x384xf32> to vector<8x128xf32>
    %296 = vector.broadcast %8 : vector<1x128xf32> to vector<8x128xf32>
    %297 = arith.addf %295, %296 : vector<8x128xf32>
    %298 = arith.mulf %284, %297 : vector<8x128xf32>
    %299 = arith.addf %294, %298 : vector<8x128xf32>
    %300 = math.tanh %299 : vector<8x128xf32>
    %cst_89 = arith.constant 1.000000e+00 : f32
    %301 = vector.broadcast %cst_89 : f32 to vector<8x128xf32>
    %302 = arith.subf %301, %293 : vector<8x128xf32>
    %303 = arith.mulf %302, %300 : vector<8x128xf32>
    %304 = arith.mulf %293, %268 : vector<8x128xf32>
    %305 = arith.addf %303, %304 : vector<8x128xf32>
    %c8_i32_90 = arith.constant 8 : i32
    %306 = arith.truncf %305 : vector<8x128xf32> to vector<8x128xbf16>
    %c0_91 = arith.constant 0 : index
    %c0_92 = arith.constant 0 : index
    %307 = vector.load %arg6[%c0_91, %c0_92] : memref<128x128xbf16, #tpu.memory_space<vmem>>, vector<128x128xbf16>
    %cst_93 = arith.constant dense<0.000000e+00> : vector<8x128xf32>
    %308 = tpu.matmul %306, %307, %cst_93 {dimension_numbers = #tpu.dot_dimension_numbers<[1], [0], [0], [1], [0, 0, 1, 1], [], []>} : vector<8x128xbf16>, vector<128x128xbf16>, vector<8x128xf32> -> vector<8x128xf32>
    %c0_94 = arith.constant 0 : index
    %c0_95 = arith.constant 0 : index
    %309 = vector.load %arg7[%c0_94, %c0_95] : memref<1x128xf32, #tpu.memory_space<vmem>>, vector<1x128xf32>
    %310 = vector.broadcast %309 : vector<1x128xf32> to vector<8x128xf32>
    %311 = arith.addf %308, %310 : vector<8x128xf32>
    %c0_96 = arith.constant 0 : index
    %c0_97 = arith.constant 0 : index
    %312 = vector.load %arg8[%c0_96, %c0_97] : memref<8x128xf32, #tpu.memory_space<vmem>>, vector<8x128xf32>
    tpu.vector_store %arg8[%c0_96, %c0_97], %311 {strides = array<i32>} : memref<8x128xf32, #tpu.memory_space<vmem>>, vector<8x128xf32>,
    return
  }
  func.func @transform_0(%arg0: i32) -> (i32, i32, i32) {
    %c0_i32 = arith.constant 0 : i32
    %c0_i32_0 = arith.constant 0 : i32
    %c0_i32_1 = arith.constant 0 : i32
    return %c0_i32, %arg0, %c0_i32_0 : i32, i32, i32
  }
  func.func @transform_1(%arg0: i32) -> (i32, i32) {
    %c0_i32 = arith.constant 0 : i32
    %c0_i32_0 = arith.constant 0 : i32
    %c0_i32_1 = arith.constant 0 : i32
    return %c0_i32, %c0_i32_0 : i32, i32
  }
  func.func @transform_2(%arg0: i32) -> (i32, i32) {
    %c0_i32 = arith.constant 0 : i32
    %c0_i32_0 = arith.constant 0 : i32
    %c0_i32_1 = arith.constant 0 : i32
    return %c0_i32, %c0_i32_0 : i32, i32
  }
  func.func @transform_3(%arg0: i32) -> (i32, i32) {
    %c0_i32 = arith.constant 0 : i32
    %c0_i32_0 = arith.constant 0 : i32
    %c0_i32_1 = arith.constant 0 : i32
    return %c0_i32, %c0_i32_0 : i32, i32
  }
  func.func @transform_4(%arg0: i32) -> (i32, i32) {
    %c0_i32 = arith.constant 0 : i32
    %c0_i32_0 = arith.constant 0 : i32
    %c0_i32_1 = arith.constant 0 : i32
    return %c0_i32, %c0_i32_0 : i32, i32
  }
  func.func @transform_5(%arg0: i32) -> (i32, i32) {
    %c0_i32 = arith.constant 0 : i32
    %c0_i32_0 = arith.constant 0 : i32
    %c0_i32_1 = arith.constant 0 : i32
    return %c0_i32, %c0_i32_0 : i32, i32
  }
  func.func @transform_6(%arg0: i32) -> (i32, i32) {
    %c0_i32 = arith.constant 0 : i32
    %c0_i32_0 = arith.constant 0 : i32
    %c0_i32_1 = arith.constant 0 : i32
    return %c0_i32, %c0_i32_0 : i32, i32
  }
  func.func @transform_7(%arg0: i32) -> (i32, i32) {
    %c0_i32 = arith.constant 0 : i32
    %c0_i32_0 = arith.constant 0 : i32
    return %arg0, %c0_i32 : i32, i32
  }
}

</mosaic_0001>

<llo_original>
// kernel: tpu_custom_call.1
$region0: #{tpu_custom_call.1}
  #allocation0 [shape = 'u32[]', space=smem, size = 0x4, offset = 0x4, fixed_abs, tag = 'smem constant byte address 0x4 - core index']
  #allocation1 [shape = 'u32[144,128]{1,0:T(1,128)}', space=vmem, size = 0x12000, scoped, tag = 'internal scratch']
  #allocation2 [shape = 'f32[64,384]{1,0:T(8,128)}', space=vmem, size = 0x18000, scoped, tag = 'scratch operand']
  %s0 = inlined_call_operand.hbm [shape: bf16[8,8,32], index: 0, kind: input, shape index: {}]
  %s1 = inlined_call_operand.hbm [shape: bf16[32,384], index: 1, kind: input, shape index: {}]
  %s2 = inlined_call_operand.hbm [shape: bf16[128,384], index: 2, kind: input, shape index: {}]
  %s3 = inlined_call_operand.vmem [shape: f32[1,384], index: 3, kind: input, shape index: {}]
  %s4 = inlined_call_operand.vmem [shape: f32[1,128], index: 4, kind: input, shape index: {}]
  %s5 = inlined_call_operand.hbm [shape: bf16[128,128], index: 5, kind: input, shape index: {}]
  %s6 = inlined_call_operand.vmem [shape: f32[1,128], index: 6, kind: input, shape index: {}]
  %s7 = inlined_call_operand.hbm [shape: f32[8,128], index: 7, kind: output, shape index: {}]
  %s8 = sld [smem:[#allocation0]]
  $region54: #{tpu_custom_call.1} parent=0
    _
  %s10 = ssub.s32 1, %s8
  %s11 = scalar_select 0, %s10, %s8
  $region1: #{tpu_custom_call.1} parent=0
    #allocation3 [shape = 'u8[16384]{0}', space=vmem, size = 0x4000, scoped, tag = 'input window, operand 0, single buffered']
    #allocation4 [shape = 's32[1]{0}', space=sflag, size = 0x4, scoped, tag = 'scoped memory for tpu_custom_call.1']
    #allocation5 [shape = 's32[1]{0}', space=sflag, size = 0x4, scoped, tag = 'scoped memory for tpu_custom_call.1']
    #allocation6 [shape = 'u8[24576]{0}', space=vmem, size = 0x6000, scoped, tag = 'input window, operand 1, single buffered']
    #allocation7 [shape = 's32[1]{0}', space=sflag, size = 0x4, scoped, tag = 'scoped memory for tpu_custom_call.1']
    #allocation8 [shape = 'u8[98304]{0}', space=vmem, size = 0x18000, scoped, tag = 'input window, operand 2, single buffered']
    #allocation9 [shape = 'u8[32768]{0}', space=vmem, size = 0x8000, scoped, tag = 'input window, operand 5, single buffered']
    #allocation10 [shape = 's32[1]{0}', space=sflag, size = 0x4, scoped, tag = 'scoped memory for tpu_custom_call.1']
    #allocation11 [shape = 'u8[4096]{0}', space=vmem, size = 0x1000, scoped, tag = 'output window, operand 0, single buffered']
    %12 = vsyncpa [#allocation4], 0
    %13 = vsyncpa [#allocation7], 0
    %14 = vsyncpa [#allocation10], 0
    %15 = vsyncpa [#allocation5], 0
    // Predicated region
    $region2: #{tpu_custom_call.1} parent=1 // pred_check
      _
    $region3: #{tpu_custom_call.1} parent=1 // pred_check_branch
      %17 = sbr.rel (0) target = $region5
    $region4: #{tpu_custom_call.1} parent=1 // pred_region
      %s19 = ssub.s32 512, 512
      %20 = vsyncadd [#allocation4], %s19
      %s21 = sshll.u32 [#allocation3], 4
      %s22 = int_to_ptr.vmem [resolvable:$true] %s21
      %27 = dma.hbm_to_vmem [thread:$0]  %s0, 512, %s22, [#allocation4], 64, 64, 4
    $region5: #{tpu_custom_call.1} parent=1 // pred_fallthru
      _
    // Predicated region
    $region6: #{tpu_custom_call.1} parent=1 // pred_check
      _
    $region7: #{tpu_custom_call.1} parent=1 // pred_check_branch
      %29 = sbr.rel (0) target = $region9
    $region8: #{tpu_custom_call.1} parent=1 // pred_region
      %s31 = ssub.s32 768, 768
      %32 = vsyncadd [#allocation7], %s31
      %s33 = sshll.u32 [#allocation6], 4
      %s34 = int_to_ptr.vmem [resolvable:$true] %s33
      %39 = dma.hbm_to_vmem [thread:$0]  %s1, 768, %s34, [#allocation7], 192, 192, 12
    $region9: #{tpu_custom_call.1} parent=1 // pred_fallthru
      _
    // Predicated region
    $region10: #{tpu_custom_call.1} parent=1 // pred_check
      _
    $region11: #{tpu_custom_call.1} parent=1 // pred_check_branch
      %41 = sbr.rel (0) target = $region13
    $region12: #{tpu_custom_call.1} parent=1 // pred_region
      %s43 = ssub.s32 3072, 3072
      %44 = vsyncadd [#allocation7], %s43
      %s45 = sshll.u32 [#allocation8], 4
      %s46 = int_to_ptr.vmem [resolvable:$true] %s45
      %51 = dma.hbm_to_vmem [thread:$0]  %s2, 3072, %s46, [#allocation7], 192, 192, 12
    $region13: #{tpu_custom_call.1} parent=1 // pred_fallthru
      _
    // Predicated region
    $region14: #{tpu_custom_call.1} parent=1 // pred_check
      _
    $region15: #{tpu_custom_call.1} parent=1 // pred_check_branch
      %53 = sbr.rel (0) target = $region17
    $region16: #{tpu_custom_call.1} parent=1 // pred_region
      _
    $region17: #{tpu_custom_call.1} parent=1 // pred_fallthru
      _
    // Predicated region
    $region18: #{tpu_custom_call.1} parent=1 // pred_check
      _
    $region19: #{tpu_custom_call.1} parent=1 // pred_check_branch
      %55 = sbr.rel (0) target = $region21
    $region20: #{tpu_custom_call.1} parent=1 // pred_region
      _
    $region21: #{tpu_custom_call.1} parent=1 // pred_fallthru
      _
    // Predicated region
    $region22: #{tpu_custom_call.1} parent=1 // pred_check
      _
    $region23: #{tpu_custom_call.1} parent=1 // pred_check_branch
      %57 = sbr.rel (0) target = $region25
    $region24: #{tpu_custom_call.1} parent=1 // pred_region
      %s59 = ssub.s32 1024, 1024
      %60 = vsyncadd [#allocation10], %s59
      %s61 = sshll.u32 [#allocation9], 4
      %s62 = int_to_ptr.vmem [resolvable:$true] %s61
      %67 = dma.hbm_to_vmem [thread:$0]  %s5, 1024, %s62, [#allocation10], 64, 64, 4
    $region25: #{tpu_custom_call.1} parent=1 // pred_fallthru
      _
    // Predicated region
    $region26: #{tpu_custom_call.1} parent=1 // pred_check
      _
    $region27: #{tpu_custom_call.1} parent=1 // pred_check_branch
      %69 = sbr.rel (0) target = $region29
    $region28: #{tpu_custom_call.1} parent=1 // pred_region
      _
    $region29: #{tpu_custom_call.1} parent=1 // pred_fallthru
      _
    // Predicated region
    $region30: #{tpu_custom_call.1} parent=1 // pred_check
      _
    $region31: #{tpu_custom_call.1} parent=1 // pred_check_branch
      %71 = sbr.rel (0) target = $region33
    $region32: #{tpu_custom_call.1} parent=1 // pred_region
      %72 = dma.done [#allocation4], 512
    $region33: #{tpu_custom_call.1} parent=1 // pred_fallthru
      _
    // Predicated region
    $region34: #{tpu_custom_call.1} parent=1 // pred_check
      _
    $region35: #{tpu_custom_call.1} parent=1 // pred_check_branch
      %74 = sbr.rel (0) target = $region37
    $region36: #{tpu_custom_call.1} parent=1 // pred_region
      %75 = dma.done [#allocation7], 768
    $region37: #{tpu_custom_call.1} parent=1 // pred_fallthru
      _
    // Predicated region
    $region38: #{tpu_custom_call.1} parent=1 // pred_check
      _
    $region39: #{tpu_custom_call.1} parent=1 // pred_check_branch
      %77 = sbr.rel (0) target = $region41
    $region40: #{tpu_custom_call.1} parent=1 // pred_region
      %78 = dma.done [#allocation7], 3072
    $region41: #{tpu_custom_call.1} parent=1 // pred_fallthru
      _
    // Predicated region
    $region42: #{tpu_custom_call.1} parent=1 // pred_check
      _
    $region43: #{tpu_custom_call.1} parent=1 // pred_check_branch
      %80 = sbr.rel (0) target = $region45
    $region44: #{tpu_custom_call.1} parent=1 // pred_region
      %81 = dma.done [#allocation10], 1024
    $region45: #{tpu_custom_call.1} parent=1 // pred_fallthru
      _
    %v83 = vld [vmem:[#allocation3] sm:$0xf]
    %v84 = vld [vmem:[#allocation3 + $0x4] sm:$0xf]
    %v85 = vld [vmem:[#allocation3 + $0x8] sm:$0xf]
    %v86 = vld [vmem:[#allocation3 + $0xc] sm:$0xf]
    %v87 = vld [vmem:[#allocation3 + $0x10] sm:$0xf]
    %v88 = vld [vmem:[#allocation3 + $0x14] sm:$0xf]
    %v89 = vld [vmem:[#allocation3 + $0x18] sm:$0xf]
    %v90 = vld [vmem:[#allocation3 + $0x1c] sm:$0xf]
    %v91 = vld [vmem:[#allocation6] sm:$0xff]
    %v92 = vld [vmem:[#allocation6 + $0x8] sm:$0xf]
    %v93 = vld [vmem:[#allocation6 + $0xc] sm:$0xff]
    %v94 = vld [vmem:[#allocation6 + $0x14] sm:$0xf]
    %v95 = vld [vmem:[#allocation6 + $0x18] sm:$0xff]
    %v96 = vld [vmem:[#allocation6 + $0x20] sm:$0xf]
    %v97 = vld [vmem:[#allocation6 + $0x24] sm:$0xff]
    %v98 = vld [vmem:[#allocation6 + $0x2c] sm:$0xf]
    %v99 = vld [vmem:[%s3] sm:$0x7]
    %v101 = vlaneseq
    %v102 = vshrl.u32 %v101, 7
    %v103 = vsub.s32 0, %v102
    %v104 = vrot.slane %v99, %v103
    %v105 = vlaneseq
    %v106 = vshrl.u32 %v105, 7
    %v107 = vsub.s32 1, %v106
    %v108 = vrot.slane %v99, %v107
    %v109 = vlaneseq
    %v110 = vshrl.u32 %v109, 7
    %v111 = vsub.s32 2, %v110
    %v112 = vrot.slane %v99, %v111
    %v124 = vunpack.c.l.b16 %v83
    %v125 = vunpack.c.l.b16 %v84
    %v126 = vunpack.c.l.b16 %v85
    %v127 = vunpack.c.l.b16 %v86
    %v128 = vunpack.c.l.b16 %v87
    %v129 = vunpack.c.l.b16 %v88
    %v130 = vunpack.c.l.b16 %v89
    %v131 = vunpack.c.l.b16 %v90
    %v132 = vpack.c.b16 %v125, %v124
    %v133 = vpack.c.b16 %v127, %v126
    %v134 = vpack.c.b16 %v129, %v128
    %v135 = vpack.c.b16 %v131, %v130
    %v144 = vunpack.c.l.b16 %v91
    %v145 = vunpack.c.h.b16 %v91
    %v146 = vunpack.c.l.b16 %v92
    %v147 = vunpack.c.l.b16 %v93
    %v148 = vunpack.c.h.b16 %v93
    %v149 = vunpack.c.l.b16 %v94
    %v150 = vunpack.c.l.b16 %v95
    %v151 = vunpack.c.h.b16 %v95
    %v152 = vunpack.c.l.b16 %v96
    %v153 = vunpack.c.l.b16 %v97
    %v154 = vunpack.c.h.b16 %v97
    %v155 = vunpack.c.l.b16 %v98
    %v156 = vpack.c.b16 %v147, %v144
    %v157 = vpack.c.b16 %v148, %v145
    %v158 = vpack.c.b16 %v149, %v146
    %v159 = vpack.c.b16 %v153, %v150
    %v160 = vpack.c.b16 %v154, %v151
    %v161 = vpack.c.b16 %v155, %v152
    %vm168 = vcmask 261120
    %v170 = vsel %vm168, %v132, 0
    %v173 = vsel %vm168, %v133, 0
    %v176 = vsel %vm168, %v134, 0
    %v179 = vsel %vm168, %v135, 0
    %181 = vmatprep.subr.bf16.mxu0 %v157
    %182 = vmatpush1.bf16.msra.mxu0 %v156
    %183 = vmatprep.subr.bf16.mxu0 %v160
    %184 = vmatpush1.bf16.msra.mxu0 %v159
    %185 = vmatprep.subr.bf16.mxu0 0
    %186 = vmatpush1.bf16.msra.mxu0 0
    %187 = vmatprep.subr.bf16.mxu0 0
    %188 = vmatpush1.bf16.msra.mxu0 0
    %189 = vmatprep.subr.bf16.mxu0 0
    %190 = vmatpush1.bf16.msra.mxu0 0
    %191 = vmatprep.subr.bf16.mxu0 0
    %192 = vmatpush1.bf16.msra.mxu0 0
    %193 = vmatprep.subr.bf16.mxu0 0
    %194 = vmatpush1.bf16.msra.mxu0 0
    %195 = vmatprep.subr.bf16.mxu0 0
    %196 = vmatpush1.bf16.msra.mxu0 0
    %197 = vmatprep.subr.bf16.mxu0 0
    %198 = vmatpush1.bf16.msra.mxu0 0
    %199 = vmatprep.subr.bf16.mxu0 0
    %200 = vmatpush1.bf16.msra.mxu0 0
    %201 = vmatprep.subr.bf16.mxu0 0
    %202 = vmatpush1.bf16.msra.mxu0 0
    %203 = vmatprep.subr.bf16.mxu0 0
    %204 = vmatpush1.bf16.msra.mxu0 0
    %205 = vmatprep.subr.bf16.mxu0 0
    %206 = vmatpush1.bf16.msra.mxu0 0
    %207 = vmatprep.subr.bf16.mxu0 0
    %208 = vmatpush1.bf16.msra.mxu0 0
    %209 = vmatprep.subr.bf16.mxu0 0
    %210 = vmatpush1.bf16.msra.mxu0 0
    %211 = vmatprep.subr.bf16.mxu0 0
    %212 = vmatpush1.bf16.msra.mxu0 0
    %213 = vmatprep.mubr.bf16.mxu0 0
    %214 = vmatmul.mubr.bf16.gmra.mrb[0].mxu0 %v170
    %v215 = vpop.f32.mrb[0].mxu0
    %v216 = vadd.f32 %v104, %v215
    %v217 = vpop.f32.mrb[0].mxu0
    %v218 = vadd.f32 %v108, %v217
    %v219 = vpop.f32.mrb[0].mxu0
    %v220 = vadd.f32 %v104, %v219
    %v221 = vpop.f32.mrb[0].mxu0
    %v222 = vadd.f32 %v108, %v221
    %223 = vmatprep.mubr.bf16.mxu0 0
    %224 = vmatmul.mubr.bf16.gmra.mrb[0].mxu0 %v173
    %v225 = vpop.f32.mrb[0].mxu0
    %v226 = vadd.f32 %v104, %v225
    %v227 = vpop.f32.mrb[0].mxu0
    %v228 = vadd.f32 %v108, %v227
    %v229 = vpop.f32.mrb[0].mxu0
    %v230 = vadd.f32 %v104, %v229
    %v231 = vpop.f32.mrb[0].mxu0
    %v232 = vadd.f32 %v108, %v231
    %233 = vmatprep.mubr.bf16.mxu0 0
    %234 = vmatmul.mubr.bf16.gmra.mrb[0].mxu0 %v176
    %v235 = vpop.f32.mrb[0].mxu0
    %v236 = vadd.f32 %v104, %v235
    %v237 = vpop.f32.mrb[0].mxu0
    %v238 = vadd.f32 %v108, %v237
    %v239 = vpop.f32.mrb[0].mxu0
    %v240 = vadd.f32 %v104, %v239
    %v241 = vpop.f32.mrb[0].mxu0
    %v242 = vadd.f32 %v108, %v241
    %243 = vmatprep.mubr.bf16.mxu0 0
    %244 = vmatmul.mubr.bf16.gmra.mrb[0].mxu0 %v179
    %v245 = vpop.f32.mrb[0].mxu0
    %v246 = vadd.f32 %v104, %v245
    %v247 = vpop.f32.mrb[0].mxu0
    %v248 = vadd.f32 %v108, %v247
    %v249 = vpop.f32.mrb[0].mxu0
    %v250 = vadd.f32 %v104, %v249
    %v251 = vpop.f32.mrb[0].mxu0
    %v252 = vadd.f32 %v108, %v251
    %253 = vdwg.mxu0
    %254 = vmatprep.subr.bf16.mxu0 0
    %255 = vmatpush1.bf16.msra.mxu0 %v158
    %256 = vmatprep.subr.bf16.mxu0 0
    %257 = vmatpush1.bf16.msra.mxu0 %v161
    %258 = vmatprep.subr.bf16.mxu0 0
    %259 = vmatpush1.bf16.msra.mxu0 0
    %260 = vmatprep.subr.bf16.mxu0 0
    %261 = vmatpush1.bf16.msra.mxu0 0
    %262 = vmatprep.subr.bf16.mxu0 0
    %263 = vmatpush1.bf16.msra.mxu0 0
    %264 = vmatprep.subr.bf16.mxu0 0
    %265 = vmatpush1.bf16.msra.mxu0 0
    %266 = vmatprep.subr.bf16.mxu0 0
    %267 = vmatpush1.bf16.msra.mxu0 0
    %268 = vmatprep.subr.bf16.mxu0 0
    %269 = vmatpush1.bf16.msra.mxu0 0
    %270 = vmatprep.subr.bf16.mxu0 0
    %271 = vmatpush1.bf16.msra.mxu0 0
    %272 = vmatprep.subr.bf16.mxu0 0
    %273 = vmatpush1.bf16.msra.mxu0 0
    %274 = vmatprep.subr.bf16.mxu0 0
    %275 = vmatpush1.bf16.msra.mxu0 0
    %276 = vmatprep.subr.bf16.mxu0 0
    %277 = vmatpush1.bf16.msra.mxu0 0
    %278 = vmatprep.subr.bf16.mxu0 0
    %279 = vmatpush1.bf16.msra.mxu0 0
    %280 = vmatprep.subr.bf16.mxu0 0
    %281 = vmatpush1.bf16.msra.mxu0 0
    %282 = vmatprep.subr.bf16.mxu0 0
    %283 = vmatpush1.bf16.msra.mxu0 0
    %284 = vmatprep.subr.bf16.mxu0 0
    %285 = vmatpush1.bf16.msra.mxu0 0
    %286 = vmatprep.mubr.bf16.mxu0 0
    %287 = vmatmul.mubr.bf16.gmra.mrb[0].mxu0 %v170
    %v288 = vpop.f32.mrb[0].mxu0
    %v289 = vadd.f32 %v112, %v288
    %v290 = vpop.f32.mrb[0].mxu0
    %v291 = vpop.f32.mrb[0].mxu0
    %v292 = vadd.f32 %v112, %v291
    %v293 = vpop.f32.mrb[0].mxu0
    %294 = vmatprep.mubr.bf16.mxu0 0
    %295 = vmatmul.mubr.bf16.gmra.mrb[0].mxu0 %v173
    %v296 = vpop.f32.mrb[0].mxu0
    %v297 = vadd.f32 %v112, %v296
    %v298 = vpop.f32.mrb[0].mxu0
    %v299 = vpop.f32.mrb[0].mxu0
    %v300 = vadd.f32 %v112, %v299
    %v301 = vpop.f32.mrb[0].mxu0
    %302 = vmatprep.mubr.bf16.mxu0 0
    %303 = vmatmul.mubr.bf16.gmra.mrb[0].mxu0 %v176
    %v304 = vpop.f32.mrb[0].mxu0
    %v305 = vadd.f32 %v112, %v304
    %v306 = vpop.f32.mrb[0].mxu0
    %v307 = vpop.f32.mrb[0].mxu0
    %v308 = vadd.f32 %v112, %v307
    %v309 = vpop.f32.mrb[0].mxu0
    %310 = vmatprep.mubr.bf16.mxu0 0
    %311 = vmatmul.mubr.bf16.gmra.mrb[0].mxu0 %v179
    %v312 = vpop.f32.mrb[0].mxu0
    %v313 = vadd.f32 %v112, %v312
    %v314 = vpop.f32.mrb[0].mxu0
    %v315 = vpop.f32.mrb[0].mxu0
    %v316 = vadd.f32 %v112, %v315
    %v317 = vpop.f32.mrb[0].mxu0
    %318 = vdwg.mxu0
    %319 = vst [vmem:[#allocation2] sm:$0xff] %v216
    %320 = vst [vmem:[#allocation2 + $0x8] sm:$0xff] %v218
    %321 = vst [vmem:[#allocation2 + $0x10] sm:$0xff] %v289
    %322 = vst [vmem:[#allocation2 + $0x18] sm:$0xff] %v220
    %323 = vst [vmem:[#allocation2 + $0x20] sm:$0xff] %v222
    %324 = vst [vmem:[#allocation2 + $0x28] sm:$0xff] %v292
    %325 = vst [vmem:[#allocation2 + $0x30] sm:$0xff] %v226
    %326 = vst [vmem:[#allocation2 + $0x38] sm:$0xff] %v228
    %327 = vst [vmem:[#allocation2 + $0x40] sm:$0xff] %v297
    %328 = vst [vmem:[#allocation2 + $0x48] sm:$0xff] %v230
    %329 = vst [vmem:[#allocation2 + $0x50] sm:$0xff] %v232
    %330 = vst [vmem:[#allocation2 + $0x58] sm:$0xff] %v300
    %331 = vst [vmem:[#allocation2 + $0x60] sm:$0xff] %v236
    %332 = vst [vmem:[#allocation2 + $0x68] sm:$0xff] %v238
    %333 = vst [vmem:[#allocation2 + $0x70] sm:$0xff] %v305
    %334 = vst [vmem:[#allocation2 + $0x78] sm:$0xff] %v240
    %335 = vst [vmem:[#allocation2 + $0x80] sm:$0xff] %v242
    %336 = vst [vmem:[#allocation2 + $0x88] sm:$0xff] %v308
    %337 = vst [vmem:[#allocation2 + $0x90] sm:$0xff] %v246
    %338 = vst [vmem:[#allocation2 + $0x98] sm:$0xff] %v248
    %339 = vst [vmem:[#allocation2 + $0xa0] sm:$0xff] %v313
    %340 = vst [vmem:[#allocation2 + $0xa8] sm:$0xff] %v250
    %341 = vst [vmem:[#allocation2 + $0xb0] sm:$0xff] %v252
    %342 = vst [vmem:[#allocation2 + $0xb8] sm:$0xff] %v316
    %v343 = vld [vmem:[%s4] sm:$0x1]
    %s344 = smul.u32 0, 3
    %s345 = smul.addr %s344, 8
    %s346 = scalar_lea.vmem [#allocation2], %s345
    %v347 = vld [vmem:[%s346] sm:$0xff]
    %v348 = vld [vmem:[%s346 + $0x8] sm:$0xff]
    %v349 = vld [vmem:[%s346 + $0x10] sm:$0xff]
    %v350 = vld [vmem:[#allocation8] sm:$0xff]
    %v351 = vld [vmem:[#allocation8 + $0x8] sm:$0xf]
    %v352 = vld [vmem:[#allocation8 + $0xc] sm:$0xff]
    %v353 = vld [vmem:[#allocation8 + $0x14] sm:$0xf]
    %v354 = vld [vmem:[#allocation8 + $0x18] sm:$0xff]
    %v355 = vld [vmem:[#allocation8 + $0x20] sm:$0xf]
    %v356 = vld [vmem:[#allocation8 + $0x24] sm:$0xff]
    %v357 = vld [vmem:[#allocation8 + $0x2c] sm:$0xf]
    %v358 = vld [vmem:[#allocation8 + $0x30] sm:$0xff]
    %v359 = vld [vmem:[#allocation8 + $0x38] sm:$0xf]
    %v360 = vld [vmem:[#allocation8 + $0x3c] sm:$0xff]
    %v361 = vld [vmem:[#allocation8 + $0x44] sm:$0xf]
    %v362 = vld [vmem:[#allocation8 + $0x48] sm:$0xff]
    %v363 = vld [vmem:[#allocation8 + $0x50] sm:$0xf]
    %v364 = vld [vmem:[#allocation8 + $0x54] sm:$0xff]
    %v365 = vld [vmem:[#allocation8 + $0x5c] sm:$0xf]
    %v366 = vld [vmem:[#allocation8 + $0x60] sm:$0xff]
    %v367 = vld [vmem:[#allocation8 + $0x68] sm:$0xf]
    %v368 = vld [vmem:[#allocation8 + $0x6c] sm:$0xff]
    %v369 = vld [vmem:[#allocation8 + $0x74] sm:$0xf]
    %v370 = vld [vmem:[#allocation8 + $0x78] sm:$0xff]
    %v371 = vld [vmem:[#allocation8 + $0x80] sm:$0xf]
    %v372 = vld [vmem:[#allocation8 + $0x84] sm:$0xff]
    %v373 = vld [vmem:[#allocation8 + $0x8c] sm:$0xf]
    %v374 = vld [vmem:[#allocation8 + $0x90] sm:$0xff]
    %v375 = vld [vmem:[#allocation8 + $0x98] sm:$0xf]
    %v376 = vld [vmem:[#allocation8 + $0x9c] sm:$0xff]
    %v377 = vld [vmem:[#allocation8 + $0xa4] sm:$0xf]
    %v378 = vld [vmem:[#allocation8 + $0xa8] sm:$0xff]
    %v379 = vld [vmem:[#allocation8 + $0xb0] sm:$0xf]
    %v380 = vld [vmem:[#allocation8 + $0xb4] sm:$0xff]
    %v381 = vld [vmem:[#allocation8 + $0xbc] sm:$0xf]
    %v414 = vunpack.c.l.b16 %v350
    %v415 = vunpack.c.h.b16 %v350
    %v416 = vunpack.c.l.b16 %v351
    %v417 = vunpack.c.l.b16 %v352
    %v418 = vunpack.c.h.b16 %v352
    %v419 = vunpack.c.l.b16 %v353
    %v420 = vunpack.c.l.b16 %v354
    %v421 = vunpack.c.h.b16 %v354
    %v422 = vunpack.c.l.b16 %v355
    %v423 = vunpack.c.l.b16 %v356
    %v424 = vunpack.c.h.b16 %v356
    %v425 = vunpack.c.l.b16 %v357
    %v426 = vunpack.c.l.b16 %v358
    %v427 = vunpack.c.h.b16 %v358
    %v428 = vunpack.c.l.b16 %v359
    %v429 = vunpack.c.l.b16 %v360
    %v430 = vunpack.c.h.b16 %v360
    %v431 = vunpack.c.l.b16 %v361
    %v432 = vunpack.c.l.b16 %v362
    %v433 = vunpack.c.h.b16 %v362
    %v434 = vunpack.c.l.b16 %v363
    %v435 = vunpack.c.l.b16 %v364
    %v436 = vunpack.c.h.b16 %v364
    %v437 = vunpack.c.l.b16 %v365
    %v438 = vunpack.c.l.b16 %v366
    %v439 = vunpack.c.h.b16 %v366
    %v440 = vunpack.c.l.b16 %v367
    %v441 = vunpack.c.l.b16 %v368
    %v442 = vunpack.c.h.b16 %v368
    %v443 = vunpack.c.l.b16 %v369
    %v444 = vunpack.c.l.b16 %v370
    %v445 = vunpack.c.h.b16 %v370
    %v446 = vunpack.c.l.b16 %v371
    %v447 = vunpack.c.l.b16 %v372
    %v448 = vunpack.c.h.b16 %v372
    %v449 = vunpack.c.l.b16 %v373
    %v450 = vunpack.c.l.b16 %v374
    %v451 = vunpack.c.h.b16 %v374
    %v452 = vunpack.c.l.b16 %v375
    %v453 = vunpack.c.l.b16 %v376
    %v454 = vunpack.c.h.b16 %v376
    %v455 = vunpack.c.l.b16 %v377
    %v456 = vunpack.c.l.b16 %v378
    %v457 = vunpack.c.h.b16 %v378
    %v458 = vunpack.c.l.b16 %v379
    %v459 = vunpack.c.l.b16 %v380
    %v460 = vunpack.c.h.b16 %v380
    %v461 = vunpack.c.l.b16 %v381
    %v462 = vpack.c.b16 %v417, %v414
    %v463 = vpack.c.b16 %v418, %v415
    %v464 = vpack.c.b16 %v419, %v416
    %v465 = vpack.c.b16 %v423, %v420
    %v466 = vpack.c.b16 %v424, %v421
    %v467 = vpack.c.b16 %v425, %v422
    %v468 = vpack.c.b16 %v429, %v426
    %v469 = vpack.c.b16 %v430, %v427
    %v470 = vpack.c.b16 %v431, %v428
    %v471 = vpack.c.b16 %v435, %v432
    %v472 = vpack.c.b16 %v436, %v433
    %v473 = vpack.c.b16 %v437, %v434
    %v474 = vpack.c.b16 %v441, %v438
    %v475 = vpack.c.b16 %v442, %v439
    %v476 = vpack.c.b16 %v443, %v440
    %v477 = vpack.c.b16 %v447, %v444
    %v478 = vpack.c.b16 %v448, %v445
    %v479 = vpack.c.b16 %v449, %v446
    %v480 = vpack.c.b16 %v453, %v450
    %v481 = vpack.c.b16 %v454, %v451
    %v482 = vpack.c.b16 %v455, %v452
    %v483 = vpack.c.b16 %v459, %v456
    %v484 = vpack.c.b16 %v460, %v457
    %v485 = vpack.c.b16 %v461, %v458
    %510 = vmatprep.subr.bf16.mxu0 %v463
    %511 = vmatpush1.bf16.msra.mxu0 %v462
    %512 = vmatprep.subr.bf16.mxu0 %v466
    %513 = vmatpush1.bf16.msra.mxu0 %v465
    %514 = vmatprep.subr.bf16.mxu0 %v469
    %515 = vmatpush1.bf16.msra.mxu0 %v468
    %516 = vmatprep.subr.bf16.mxu0 %v472
    %517 = vmatpush1.bf16.msra.mxu0 %v471
    %518 = vmatprep.subr.bf16.mxu0 %v475
    %519 = vmatpush1.bf16.msra.mxu0 %v474
    %520 = vmatprep.subr.bf16.mxu0 %v478
    %521 = vmatpush1.bf16.msra.mxu0 %v477
    %522 = vmatprep.subr.bf16.mxu0 %v481
    %523 = vmatpush1.bf16.msra.mxu0 %v480
    %524 = vmatprep.subr.bf16.mxu0 %v484
    %525 = vmatpush1.bf16.msra.mxu0 %v483
    %526 = vmatprep.subr.bf16.mxu0 0
    %527 = vmatpush1.bf16.msra.mxu0 0
    %528 = vmatprep.subr.bf16.mxu0 0
    %529 = vmatpush1.bf16.msra.mxu0 0
    %530 = vmatprep.subr.bf16.mxu0 0
    %531 = vmatpush1.bf16.msra.mxu0 0
    %532 = vmatprep.subr.bf16.mxu0 0
    %533 = vmatpush1.bf16.msra.mxu0 0
    %534 = vmatprep.subr.bf16.mxu0 0
    %535 = vmatpush1.bf16.msra.mxu0 0
    %536 = vmatprep.subr.bf16.mxu0 0
    %537 = vmatpush1.bf16.msra.mxu0 0
    %538 = vmatprep.subr.bf16.mxu0 0
    %539 = vmatpush1.bf16.msra.mxu0 0
    %540 = vmatprep.subr.bf16.mxu0 0
    %541 = vmatpush1.bf16.msra.mxu0 0
    %542 = vmatprep.mubr.bf16.mxu0 0
    %543 = vmatmul.mubr.bf16.gmra.mrb[0].mxu0 0
    %v544 = vpop.f32.mrb[0].mxu0
    %v545 = vadd.f32 0.0, %v544
    %v546 = vpop.f32.mrb[0].mxu0
    %v547 = vadd.f32 0.0, %v546
    %v548 = vpop.f32.mrb[0].mxu0
    %v549 = vpop.f32.mrb[0].mxu0
    %550 = vdwg.mxu0
    %551 = vmatprep.subr.bf16.mxu0 0
    %552 = vmatpush1.bf16.msra.mxu0 %v464
    %553 = vmatprep.subr.bf16.mxu0 0
    %554 = vmatpush1.bf16.msra.mxu0 %v467
    %555 = vmatprep.subr.bf16.mxu0 0
    %556 = vmatpush1.bf16.msra.mxu0 %v470
    %557 = vmatprep.subr.bf16.mxu0 0
    %558 = vmatpush1.bf16.msra.mxu0 %v473
    %559 = vmatprep.subr.bf16.mxu0 0
    %560 = vmatpush1.bf16.msra.mxu0 %v476
    %561 = vmatprep.subr.bf16.mxu0 0
    %562 = vmatpush1.bf16.msra.mxu0 %v479
    %563 = vmatprep.subr.bf16.mxu0 0
    %564 = vmatpush1.bf16.msra.mxu0 %v482
    %565 = vmatprep.subr.bf16.mxu0 0
    %566 = vmatpush1.bf16.msra.mxu0 %v485
    %567 = vmatprep.subr.bf16.mxu0 0
    %568 = vmatpush1.bf16.msra.mxu0 0
    %569 = vmatprep.subr.bf16.mxu0 0
    %570 = vmatpush1.bf16.msra.mxu0 0
    %571 = vmatprep.subr.bf16.mxu0 0
    %572 = vmatpush1.bf16.msra.mxu0 0
    %573 = vmatprep.subr.bf16.mxu0 0
    %574 = vmatpush1.bf16.msra.mxu0 0
    %575 = vmatprep.subr.bf16.mxu0 0
    %576 = vmatpush1.bf16.msra.mxu0 0
    %577 = vmatprep.subr.bf16.mxu0 0
    %578 = vmatpush1.bf16.msra.mxu0 0
    %579 = vmatprep.subr.bf16.mxu0 0
    %580 = vmatpush1.bf16.msra.mxu0 0
    %581 = vmatprep.subr.bf16.mxu0 0
    %582 = vmatpush1.bf16.msra.mxu0 0
    %583 = vmatprep.mubr.bf16.mxu0 0
    %584 = vmatmul.mubr.bf16.gmra.mrb[0].mxu0 0
    %v585 = vpop.f32.mrb[0].mxu0
    %v586 = vadd.f32 0.0, %v585
    %v587 = vpop.f32.mrb[0].mxu0
    %v588 = vpop.f32.mrb[0].mxu0
    %v589 = vpop.f32.mrb[0].mxu0
    %590 = vdwg.mxu0
    %v591 = vadd.f32 %v347, %v545
    %v592 = vsub.f32 0.0, %v591
    %v593 = vmul.f32 %v592, 1.442695
    %v594 = vpow.pop %v593
    %v595 = vadd.f32 %v594, 1.0
    %v596 = vrcp.pop %v595
    %v597 = vadd.f32 %v348, %v547
    %v598 = vsub.f32 0.0, %v597
    %v599 = vmul.f32 %v598, 1.442695
    %v600 = vpow.pop %v599
    %v601 = vadd.f32 %v600, 1.0
    %v602 = vrcp.pop %v601
    %v604 = vlaneseq
    %v605 = vshrl.u32 %v604, 7
    %v606 = vsub.s32 0, %v605
    %v607 = vrot.slane %v343, %v606
    %v609 = vadd.f32 %v586, %v607
    %v610 = vmul.f32 %v596, %v609
    %v611 = vadd.f32 %v349, %v610
    %v612 = vtanh.pop %v611
    %v613 = vsub.f32 1.0, %v602
    %v614 = vmul.f32 %v613, %v612
    %v615 = vmul.f32 %v602, 0.0
    %v616 = vadd.f32 %v614, %v615
    %s617 = smul.u32 1, 3
    %s618 = smul.addr %s617, 8
    %s619 = scalar_lea.vmem [#allocation2], %s618
    %v620 = vld [vmem:[%s619] sm:$0xff]
    %v621 = vld [vmem:[%s619 + $0x8] sm:$0xff]
    %v622 = vld [vmem:[%s619 + $0x10] sm:$0xff]
    %v623 = vpack.c.bf16 %v616, %v616
    %624 = vmatprep.subr.bf16.mxu0 %v463
    %625 = vmatpush1.bf16.msra.mxu0 %v462
    %626 = vmatprep.subr.bf16.mxu0 %v466
    %627 = vmatpush1.bf16.msra.mxu0 %v465
    %628 = vmatprep.subr.bf16.mxu0 %v469
    %629 = vmatpush1.bf16.msra.mxu0 %v468
    %630 = vmatprep.subr.bf16.mxu0 %v472
    %631 = vmatpush1.bf16.msra.mxu0 %v471
    %632 = vmatprep.subr.bf16.mxu0 %v475
    %633 = vmatpush1.bf16.msra.mxu0 %v474
    %634 = vmatprep.subr.bf16.mxu0 %v478
    %635 = vmatpush1.bf16.msra.mxu0 %v477
    %636 = vmatprep.subr.bf16.mxu0 %v481
    %637 = vmatpush1.bf16.msra.mxu0 %v480
    %638 = vmatprep.subr.bf16.mxu0 %v484
    %639 = vmatpush1.bf16.msra.mxu0 %v483
    %640 = vmatprep.subr.bf16.mxu0 0
    %641 = vmatpush1.bf16.msra.mxu0 0
    %642 = vmatprep.subr.bf16.mxu0 0
    %643 = vmatpush1.bf16.msra.mxu0 0
    %644 = vmatprep.subr.bf16.mxu0 0
    %645 = vmatpush1.bf16.msra.mxu0 0
    %646 = vmatprep.subr.bf16.mxu0 0
    %647 = vmatpush1.bf16.msra.mxu0 0
    %648 = vmatprep.subr.bf16.mxu0 0
    %649 = vmatpush1.bf16.msra.mxu0 0
    %650 = vmatprep.subr.bf16.mxu0 0
    %651 = vmatpush1.bf16.msra.mxu0 0
    %652 = vmatprep.subr.bf16.mxu0 0
    %653 = vmatpush1.bf16.msra.mxu0 0
    %654 = vmatprep.subr.bf16.mxu0 0
    %655 = vmatpush1.bf16.msra.mxu0 0
    %656 = vmatprep.mubr.bf16.mxu0 0
    %657 = vmatmul.mubr.bf16.gmra.mrb[0].mxu0 %v623
    %v658 = vpop.f32.mrb[0].mxu0
    %v659 = vadd.f32 0.0, %v658
    %v660 = vpop.f32.mrb[0].mxu0
    %v661 = vadd.f32 0.0, %v660
    %v662 = vpop.f32.mrb[0].mxu0
    %v663 = vpop.f32.mrb[0].mxu0
    %664 = vdwg.mxu0
    %665 = vmatprep.subr.bf16.mxu0 0
    %666 = vmatpush1.bf16.msra.mxu0 %v464
    %667 = vmatprep.subr.bf16.mxu0 0
    %668 = vmatpush1.bf16.msra.mxu0 %v467
    %669 = vmatprep.subr.bf16.mxu0 0
    %670 = vmatpush1.bf16.msra.mxu0 %v470
    %671 = vmatprep.subr.bf16.mxu0 0
    %672 = vmatpush1.bf16.msra.mxu0 %v473
    %673 = vmatprep.subr.bf16.mxu0 0
    %674 = vmatpush1.bf16.msra.mxu0 %v476
    %675 = vmatprep.subr.bf16.mxu0 0
    %676 = vmatpush1.bf16.msra.mxu0 %v479
    %677 = vmatprep.subr.bf16.mxu0 0
    %678 = vmatpush1.bf16.msra.mxu0 %v482
    %679 = vmatprep.subr.bf16.mxu0 0
    %680 = vmatpush1.bf16.msra.mxu0 %v485
    %681 = vmatprep.subr.bf16.mxu0 0
    %682 = vmatpush1.bf16.msra.mxu0 0
    %683 = vmatprep.subr.bf16.mxu0 0
    %684 = vmatpush1.bf16.msra.mxu0 0
    %685 = vmatprep.subr.bf16.mxu0 0
    %686 = vmatpush1.bf16.msra.mxu0 0
    %687 = vmatprep.subr.bf16.mxu0 0
    %688 = vmatpush1.bf16.msra.mxu0 0
    %689 = vmatprep.subr.bf16.mxu0 0
    %690 = vmatpush1.bf16.msra.mxu0 0
    %691 = vmatprep.subr.bf16.mxu0 0
    %692 = vmatpush1.bf16.msra.mxu0 0
    %693 = vmatprep.subr.bf16.mxu0 0
    %694 = vmatpush1.bf16.msra.mxu0 0
    %695 = vmatprep.subr.bf16.mxu0 0
    %696 = vmatpush1.bf16.msra.mxu0 0
    %697 = vmatprep.mubr.bf16.mxu0 0
    %698 = vmatmul.mubr.bf16.gmra.mrb[0].mxu0 %v623
    %v699 = vpop.f32.mrb[0].mxu0
    %v700 = vadd.f32 0.0, %v699
    %v701 = vpop.f32.mrb[0].mxu0
    %v702 = vpop.f32.mrb[0].mxu0
    %v703 = vpop.f32.mrb[0].mxu0
    %704 = vdwg.mxu0
    %v705 = vadd.f32 %v620, %v659
    %v706 = vsub.f32 0.0, %v705
    %v707 = vmul.f32 %v706, 1.442695
    %v708 = vpow.pop %v707
    %v709 = vadd.f32 %v708, 1.0
    %v710 = vrcp.pop %v709
    %v711 = vadd.f32 %v621, %v661
    %v712 = vsub.f32 0.0, %v711
    %v713 = vmul.f32 %v712, 1.442695
    %v714 = vpow.pop %v713
    %v715 = vadd.f32 %v714, 1.0
    %v716 = vrcp.pop %v715
    %v717 = vadd.f32 %v700, %v607
    %v718 = vmul.f32 %v710, %v717
    %v719 = vadd.f32 %v622, %v718
    %v720 = vtanh.pop %v719
    %v721 = vsub.f32 1.0, %v716
    %v722 = vmul.f32 %v721, %v720
    %v723 = vmul.f32 %v716, %v616
    %v724 = vadd.f32 %v722, %v723
    %s725 = smul.u32 2, 3
    %s726 = smul.addr %s725, 8
    %s727 = scalar_lea.vmem [#allocation2], %s726
    %v728 = vld [vmem:[%s727] sm:$0xff]
    %v729 = vld [vmem:[%s727 + $0x8] sm:$0xff]
    %v730 = vld [vmem:[%s727 + $0x10] sm:$0xff]
    %v731 = vpack.c.bf16 %v724, %v724
    %732 = vmatprep.subr.bf16.mxu0 %v463
    %733 = vmatpush1.bf16.msra.mxu0 %v462
    %734 = vmatprep.subr.bf16.mxu0 %v466
    %735 = vmatpush1.bf16.msra.mxu0 %v465
    %736 = vmatprep.subr.bf16.mxu0 %v469
    %737 = vmatpush1.bf16.msra.mxu0 %v468
    %738 = vmatprep.subr.bf16.mxu0 %v472
    %739 = vmatpush1.bf16.msra.mxu0 %v471
    %740 = vmatprep.subr.bf16.mxu0 %v475
    %741 = vmatpush1.bf16.msra.mxu0 %v474
    %742 = vmatprep.subr.bf16.mxu0 %v478
    %743 = vmatpush1.bf16.msra.mxu0 %v477
    %744 = vmatprep.subr.bf16.mxu0 %v481
    %745 = vmatpush1.bf16.msra.mxu0 %v480
    %746 = vmatprep.subr.bf16.mxu0 %v484
    %747 = vmatpush1.bf16.msra.mxu0 %v483
    %748 = vmatprep.subr.bf16.mxu0 0
    %749 = vmatpush1.bf16.msra.mxu0 0
    %750 = vmatprep.subr.bf16.mxu0 0
    %751 = vmatpush1.bf16.msra.mxu0 0
    %752 = vmatprep.subr.bf16.mxu0 0
    %753 = vmatpush1.bf16.msra.mxu0 0
    %754 = vmatprep.subr.bf16.mxu0 0
    %755 = vmatpush1.bf16.msra.mxu0 0
    %756 = vmatprep.subr.bf16.mxu0 0
    %757 = vmatpush1.bf16.msra.mxu0 0
    %758 = vmatprep.subr.bf16.mxu0 0
    %759 = vmatpush1.bf16.msra.mxu0 0
    %760 = vmatprep.subr.bf16.mxu0 0
    %761 = vmatpush1.bf16.msra.mxu0 0
    %762 = vmatprep.subr.bf16.mxu0 0
    %763 = vmatpush1.bf16.msra.mxu0 0
    %764 = vmatprep.mubr.bf16.mxu0 0
    %765 = vmatmul.mubr.bf16.gmra.mrb[0].mxu0 %v731
    %v766 = vpop.f32.mrb[0].mxu0
    %v767 = vadd.f32 0.0, %v766
    %v768 = vpop.f32.mrb[0].mxu0
    %v769 = vadd.f32 0.0, %v768
    %v770 = vpop.f32.mrb[0].mxu0
    %v771 = vpop.f32.mrb[0].mxu0
    %772 = vdwg.mxu0
    %773 = vmatprep.subr.bf16.mxu0 0
    %774 = vmatpush1.bf16.msra.mxu0 %v464
    %775 = vmatprep.subr.bf16.mxu0 0
    %776 = vmatpush1.bf16.msra.mxu0 %v467
    %777 = vmatprep.subr.bf16.mxu0 0
    %778 = vmatpush1.bf16.msra.mxu0 %v470
    %779 = vmatprep.subr.bf16.mxu0 0
    %780 = vmatpush1.bf16.msra.mxu0 %v473
    %781 = vmatprep.subr.bf16.mxu0 0
    %782 = vmatpush1.bf16.msra.mxu0 %v476
    %783 = vmatprep.subr.bf16.mxu0 0
    %784 = vmatpush1.bf16.msra.mxu0 %v479
    %785 = vmatprep.subr.bf16.mxu0 0
    %786 = vmatpush1.bf16.msra.mxu0 %v482
    %787 = vmatprep.subr.bf16.mxu0 0
    %788 = vmatpush1.bf16.msra.mxu0 %v485
    %789 = vmatprep.subr.bf16.mxu0 0
    %790 = vmatpush1.bf16.msra.mxu0 0
    %791 = vmatprep.subr.bf16.mxu0 0
    %792 = vmatpush1.bf16.msra.mxu0 0
    %793 = vmatprep.subr.bf16.mxu0 0
    %794 = vmatpush1.bf16.msra.mxu0 0
    %795 = vmatprep.subr.bf16.mxu0 0
    %796 = vmatpush1.bf16.msra.mxu0 0
    %797 = vmatprep.subr.bf16.mxu0 0
    %798 = vmatpush1.bf16.msra.mxu0 0
    %799 = vmatprep.subr.bf16.mxu0 0
    %800 = vmatpush1.bf16.msra.mxu0 0
    %801 = vmatprep.subr.bf16.mxu0 0
    %802 = vmatpush1.bf16.msra.mxu0 0
    %803 = vmatprep.subr.bf16.mxu0 0
    %804 = vmatpush1.bf16.msra.mxu0 0
    %805 = vmatprep.mubr.bf16.mxu0 0
    %806 = vmatmul.mubr.bf16.gmra.mrb[0].mxu0 %v731
    %v807 = vpop.f32.mrb[0].mxu0
    %v808 = vadd.f32 0.0, %v807
    %v809 = vpop.f32.mrb[0].mxu0
    %v810 = vpop.f32.mrb[0].mxu0
    %v811 = vpop.f32.mrb[0].mxu0
    %812 = vdwg.mxu0
    %v813 = vadd.f32 %v728, %v767
    %v814 = vsub.f32 0.0, %v813
    %v815 = vmul.f32 %v814, 1.442695
    %v816 = vpow.pop %v815
    %v817 = vadd.f32 %v816, 1.0
    %v818 = vrcp.pop %v817
    %v819 = vadd.f32 %v729, %v769
    %v820 = vsub.f32 0.0, %v819
    %v821 = vmul.f32 %v820, 1.442695
    %v822 = vpow.pop %v821
    %v823 = vadd.f32 %v822, 1.0
    %v824 = vrcp.pop %v823
    %v825 = vadd.f32 %v808, %v607
    %v826 = vmul.f32 %v818, %v825
    %v827 = vadd.f32 %v730, %v826
    %v828 = vtanh.pop %v827
    %v829 = vsub.f32 1.0, %v824
    %v830 = vmul.f32 %v829, %v828
    %v831 = vmul.f32 %v824, %v724
    %v832 = vadd.f32 %v830, %v831
    %s833 = smul.u32 3, 3
    %s834 = smul.addr %s833, 8
    %s835 = scalar_lea.vmem [#allocation2], %s834
    %v836 = vld [vmem:[%s835] sm:$0xff]
    %v837 = vld [vmem:[%s835 + $0x8] sm:$0xff]
    %v838 = vld [vmem:[%s835 + $0x10] sm:$0xff]
    %v839 = vpack.c.bf16 %v832, %v832
    %840 = vmatprep.subr.bf16.mxu0 %v463
    %841 = vmatpush1.bf16.msra.mxu0 %v462
    %842 = vmatprep.subr.bf16.mxu0 %v466
    %843 = vmatpush1.bf16.msra.mxu0 %v465
    %844 = vmatprep.subr.bf16.mxu0 %v469
    %845 = vmatpush1.bf16.msra.mxu0 %v468
    %846 = vmatprep.subr.bf16.mxu0 %v472
    %847 = vmatpush1.bf16.msra.mxu0 %v471
    %848 = vmatprep.subr.bf16.mxu0 %v475
    %849 = vmatpush1.bf16.msra.mxu0 %v474
    %850 = vmatprep.subr.bf16.mxu0 %v478
    %851 = vmatpush1.bf16.msra.mxu0 %v477
    %852 = vmatprep.subr.bf16.mxu0 %v481
    %853 = vmatpush1.bf16.msra.mxu0 %v480
    %854 = vmatprep.subr.bf16.mxu0 %v484
    %855 = vmatpush1.bf16.msra.mxu0 %v483
    %856 = vmatprep.subr.bf16.mxu0 0
    %857 = vmatpush1.bf16.msra.mxu0 0
    %858 = vmatprep.subr.bf16.mxu0 0
    %859 = vmatpush1.bf16.msra.mxu0 0
    %860 = vmatprep.subr.bf16.mxu0 0
    %861 = vmatpush1.bf16.msra.mxu0 0
    %862 = vmatprep.subr.bf16.mxu0 0
    %863 = vmatpush1.bf16.msra.mxu0 0
    %864 = vmatprep.subr.bf16.mxu0 0
    %865 = vmatpush1.bf16.msra.mxu0 0
    %866 = vmatprep.subr.bf16.mxu0 0
    %867 = vmatpush1.bf16.msra.mxu0 0
    %868 = vmatprep.subr.bf16.mxu0 0
    %869 = vmatpush1.bf16.msra.mxu0 0
    %870 = vmatprep.subr.bf16.mxu0 0
    %871 = vmatpush1.bf16.msra.mxu0 0
    %872 = vmatprep.mubr.bf16.mxu0 0
    %873 = vmatmul.mubr.bf16.gmra.mrb[0].mxu0 %v839
    %v874 = vpop.f32.mrb[0].mxu0
    %v875 = vadd.f32 0.0, %v874
    %v876 = vpop.f32.mrb[0].mxu0
    %v877 = vadd.f32 0.0, %v876
    %v878 = vpop.f32.mrb[0].mxu0
    %v879 = vpop.f32.mrb[0].mxu0
    %880 = vdwg.mxu0
    %881 = vmatprep.subr.bf16.mxu0 0
    %882 = vmatpush1.bf16.msra.mxu0 %v464
    %883 = vmatprep.subr.bf16.mxu0 0
    %884 = vmatpush1.bf16.msra.mxu0 %v467
    %885 = vmatprep.subr.bf16.mxu0 0
    %886 = vmatpush1.bf16.msra.mxu0 %v470
    %887 = vmatprep.subr.bf16.mxu0 0
    %888 = vmatpush1.bf16.msra.mxu0 %v473
    %889 = vmatprep.subr.bf16.mxu0 0
    %890 = vmatpush1.bf16.msra.mxu0 %v476
    %891 = vmatprep.subr.bf16.mxu0 0
    %892 = vmatpush1.bf16.msra.mxu0 %v479
    %893 = vmatprep.subr.bf16.mxu0 0
    %894 = vmatpush1.bf16.msra.mxu0 %v482
    %895 = vmatprep.subr.bf16.mxu0 0
    %896 = vmatpush1.bf16.msra.mxu0 %v485
    %897 = vmatprep.subr.bf16.mxu0 0
    %898 = vmatpush1.bf16.msra.mxu0 0
    %899 = vmatprep.subr.bf16.mxu0 0
    %900 = vmatpush1.bf16.msra.mxu0 0
    %901 = vmatprep.subr.bf16.mxu0 0
    %902 = vmatpush1.bf16.msra.mxu0 0
    %903 = vmatprep.subr.bf16.mxu0 0
    %904 = vmatpush1.bf16.msra.mxu0 0
    %905 = vmatprep.subr.bf16.mxu0 0
    %906 = vmatpush1.bf16.msra.mxu0 0
    %907 = vmatprep.subr.bf16.mxu0 0
    %908 = vmatpush1.bf16.msra.mxu0 0
    %909 = vmatprep.subr.bf16.mxu0 0
    %910 = vmatpush1.bf16.msra.mxu0 0
    %911 = vmatprep.subr.bf16.mxu0 0
    %912 = vmatpush1.bf16.msra.mxu0 0
    %913 = vmatprep.mubr.bf16.mxu0 0
    %914 = vmatmul.mubr.bf16.gmra.mrb[0].mxu0 %v839
    %v915 = vpop.f32.mrb[0].mxu0
    %v916 = vadd.f32 0.0, %v915
    %v917 = vpop.f32.mrb[0].mxu0
    %v918 = vpop.f32.mrb[0].mxu0
    %v919 = vpop.f32.mrb[0].mxu0
    %920 = vdwg.mxu0
    %v921 = vadd.f32 %v836, %v875
    %v922 = vsub.f32 0.0, %v921
    %v923 = vmul.f32 %v922, 1.442695
    %v924 = vpow.pop %v923
    %v925 = vadd.f32 %v924, 1.0
    %v926 = vrcp.pop %v925
    %v927 = vadd.f32 %v837, %v877
    %v928 = vsub.f32 0.0, %v927
    %v929 = vmul.f32 %v928, 1.442695
    %v930 = vpow.pop %v929
    %v931 = vadd.f32 %v930, 1.0
    %v932 = vrcp.pop %v931
    %v933 = vadd.f32 %v916, %v607
    %v934 = vmul.f32 %v926, %v933
    %v935 = vadd.f32 %v838, %v934
    %v936 = vtanh.pop %v935
    %v937 = vsub.f32 1.0, %v932
    %v938 = vmul.f32 %v937, %v936
    %v939 = vmul.f32 %v932, %v832
    %v940 = vadd.f32 %v938, %v939
    %s941 = smul.u32 4, 3
    %s942 = smul.addr %s941, 8
    %s943 = scalar_lea.vmem [#allocation2], %s942
    %v944 = vld [vmem:[%s943] sm:$0xff]
    %v945 = vld [vmem:[%s943 + $0x8] sm:$0xff]
    %v946 = vld [vmem:[%s943 + $0x10] sm:$0xff]
    %v947 = vpack.c.bf16 %v940, %v940
    %948 = vmatprep.subr.bf16.mxu0 %v463
    %949 = vmatpush1.bf16.msra.mxu0 %v462
    %950 = vmatprep.subr.bf16.mxu0 %v466
    %951 = vmatpush1.bf16.msra.mxu0 %v465
    %952 = vmatprep.subr.bf16.mxu0 %v469
    %953 = vmatpush1.bf16.msra.mxu0 %v468
    %954 = vmatprep.subr.bf16.mxu0 %v472
    %955 = vmatpush1.bf16.msra.mxu0 %v471
    %956 = vmatprep.subr.bf16.mxu0 %v475
    %957 = vmatpush1.bf16.msra.mxu0 %v474
    %958 = vmatprep.subr.bf16.mxu0 %v478
    %959 = vmatpush1.bf16.msra.mxu0 %v477
    %960 = vmatprep.subr.bf16.mxu0 %v481
    %961 = vmatpush1.bf16.msra.mxu0 %v480
    %962 = vmatprep.subr.bf16.mxu0 %v484
    %963 = vmatpush1.bf16.msra.mxu0 %v483
    %964 = vmatprep.subr.bf16.mxu0 0
    %965 = vmatpush1.bf16.msra.mxu0 0
    %966 = vmatprep.subr.bf16.mxu0 0
    %967 = vmatpush1.bf16.msra.mxu0 0
    %968 = vmatprep.subr.bf16.mxu0 0
    %969 = vmatpush1.bf16.msra.mxu0 0
    %970 = vmatprep.subr.bf16.mxu0 0
    %971 = vmatpush1.bf16.msra.mxu0 0
    %972 = vmatprep.subr.bf16.mxu0 0
    %973 = vmatpush1.bf16.msra.mxu0 0
    %974 = vmatprep.subr.bf16.mxu0 0
    %975 = vmatpush1.bf16.msra.mxu0 0
    %976 = vmatprep.subr.bf16.mxu0 0
    %977 = vmatpush1.bf16.msra.mxu0 0
    %978 = vmatprep.subr.bf16.mxu0 0
    %979 = vmatpush1.bf16.msra.mxu0 0
    %980 = vmatprep.mubr.bf16.mxu0 0
    %981 = vmatmul.mubr.bf16.gmra.mrb[0].mxu0 %v947
    %v982 = vpop.f32.mrb[0].mxu0
    %v983 = vadd.f32 0.0, %v982
    %v984 = vpop.f32.mrb[0].mxu0
    %v985 = vadd.f32 0.0, %v984
    %v986 = vpop.f32.mrb[0].mxu0
    %v987 = vpop.f32.mrb[0].mxu0
    %988 = vdwg.mxu0
    %989 = vmatprep.subr.bf16.mxu0 0
    %990 = vmatpush1.bf16.msra.mxu0 %v464
    %991 = vmatprep.subr.bf16.mxu0 0
    %992 = vmatpush1.bf16.msra.mxu0 %v467
    %993 = vmatprep.subr.bf16.mxu0 0
    %994 = vmatpush1.bf16.msra.mxu0 %v470
    %995 = vmatprep.subr.bf16.mxu0 0
    %996 = vmatpush1.bf16.msra.mxu0 %v473
    %997 = vmatprep.subr.bf16.mxu0 0
    %998 = vmatpush1.bf16.msra.mxu0 %v476
    %999 = vmatprep.subr.bf16.mxu0 0
    %1000 = vmatpush1.bf16.msra.mxu0 %v479
    %1001 = vmatprep.subr.bf16.mxu0 0
    %1002 = vmatpush1.bf16.msra.mxu0 %v482
    %1003 = vmatprep.subr.bf16.mxu0 0
    %1004 = vmatpush1.bf16.msra.mxu0 %v485
    %1005 = vmatprep.subr.bf16.mxu0 0
    %1006 = vmatpush1.bf16.msra.mxu0 0
    %1007 = vmatprep.subr.bf16.mxu0 0
    %1008 = vmatpush1.bf16.msra.mxu0 0
    %1009 = vmatprep.subr.bf16.mxu0 0
    %1010 = vmatpush1.bf16.msra.mxu0 0
    %1011 = vmatprep.subr.bf16.mxu0 0
    %1012 = vmatpush1.bf16.msra.mxu0 0
    %1013 = vmatprep.subr.bf16.mxu0 0
    %1014 = vmatpush1.bf16.msra.mxu0 0
    %1015 = vmatprep.subr.bf16.mxu0 0
    %1016 = vmatpush1.bf16.msra.mxu0 0
    %1017 = vmatprep.subr.bf16.mxu0 0
    %1018 = vmatpush1.bf16.msra.mxu0 0
    %1019 = vmatprep.subr.bf16.mxu0 0
    %1020 = vmatpush1.bf16.msra.mxu0 0
    %1021 = vmatprep.mubr.bf16.mxu0 0
    %1022 = vmatmul.mubr.bf16.gmra.mrb[0].mxu0 %v947
    %v1023 = vpop.f32.mrb[0].mxu0
    %v1024 = vadd.f32 0.0, %v1023
    %v1025 = vpop.f32.mrb[0].mxu0
    %v1026 = vpop.f32.mrb[0].mxu0
    %v1027 = vpop.f32.mrb[0].mxu0
    %1028 = vdwg.mxu0
    %v1029 = vadd.f32 %v944, %v983
    %v1030 = vsub.f32 0.0, %v1029
    %v1031 = vmul.f32 %v1030, 1.442695
    %v1032 = vpow.pop %v1031
    %v1033 = vadd.f32 %v1032, 1.0
    %v1034 = vrcp.pop %v1033
    %v1035 = vadd.f32 %v945, %v985
    %v1036 = vsub.f32 0.0, %v1035
    %v1037 = vmul.f32 %v1036, 1.442695
    %v1038 = vpow.pop %v1037
    %v1039 = vadd.f32 %v1038, 1.0
    %v1040 = vrcp.pop %v1039
    %v1041 = vadd.f32 %v1024, %v607
    %v1042 = vmul.f32 %v1034, %v1041
    %v1043 = vadd.f32 %v946, %v1042
    %v1044 = vtanh.pop %v1043
    %v1045 = vsub.f32 1.0, %v1040
    %v1046 = vmul.f32 %v1045, %v1044
    %v1047 = vmul.f32 %v1040, %v940
    %v1048 = vadd.f32 %v1046, %v1047
    %s1049 = smul.u32 5, 3
    %s1050 = smul.addr %s1049, 8
    %s1051 = scalar_lea.vmem [#allocation2], %s1050
    %v1052 = vld [vmem:[%s1051] sm:$0xff]
    %v1053 = vld [vmem:[%s1051 + $0x8] sm:$0xff]
    %v1054 = vld [vmem:[%s1051 + $0x10] sm:$0xff]
    %v1055 = vpack.c.bf16 %v1048, %v1048
    %1056 = vmatprep.subr.bf16.mxu0 %v463
    %1057 = vmatpush1.bf16.msra.mxu0 %v462
    %1058 = vmatprep.subr.bf16.mxu0 %v466
    %1059 = vmatpush1.bf16.msra.mxu0 %v465
    %1060 = vmatprep.subr.bf16.mxu0 %v469
    %1061 = vmatpush1.bf16.msra.mxu0 %v468
    %1062 = vmatprep.subr.bf16.mxu0 %v472
    %1063 = vmatpush1.bf16.msra.mxu0 %v471
    %1064 = vmatprep.subr.bf16.mxu0 %v475
    %1065 = vmatpush1.bf16.msra.mxu0 %v474
    %1066 = vmatprep.subr.bf16.mxu0 %v478
    %1067 = vmatpush1.bf16.msra.mxu0 %v477
    %1068 = vmatprep.subr.bf16.mxu0 %v481
    %1069 = vmatpush1.bf16.msra.mxu0 %v480
    %1070 = vmatprep.subr.bf16.mxu0 %v484
    %1071 = vmatpush1.bf16.msra.mxu0 %v483
    %1072 = vmatprep.subr.bf16.mxu0 0
    %1073 = vmatpush1.bf16.msra.mxu0 0
    %1074 = vmatprep.subr.bf16.mxu0 0
    %1075 = vmatpush1.bf16.msra.mxu0 0
    %1076 = vmatprep.subr.bf16.mxu0 0
    %1077 = vmatpush1.bf16.msra.mxu0 0
    %1078 = vmatprep.subr.bf16.mxu0 0
    %1079 = vmatpush1.bf16.msra.mxu0 0
    %1080 = vmatprep.subr.bf16.mxu0 0
    %1081 = vmatpush1.bf16.msra.mxu0 0
    %1082 = vmatprep.subr.bf16.mxu0 0
    %1083 = vmatpush1.bf16.msra.mxu0 0
    %1084 = vmatprep.subr.bf16.mxu0 0
    %1085 = vmatpush1.bf16.msra.mxu0 0
    %1086 = vmatprep.subr.bf16.mxu0 0
    %1087 = vmatpush1.bf16.msra.mxu0 0
    %1088 = vmatprep.mubr.bf16.mxu0 0
    %1089 = vmatmul.mubr.bf16.gmra.mrb[0].mxu0 %v1055
    %v1090 = vpop.f32.mrb[0].mxu0
    %v1091 = vadd.f32 0.0, %v1090
    %v1092 = vpop.f32.mrb[0].mxu0
    %v1093 = vadd.f32 0.0, %v1092
    %v1094 = vpop.f32.mrb[0].mxu0
    %v1095 = vpop.f32.mrb[0].mxu0
    %1096 = vdwg.mxu0
    %1097 = vmatprep.subr.bf16.mxu0 0
    %1098 = vmatpush1.bf16.msra.mxu0 %v464
    %1099 = vmatprep.subr.bf16.mxu0 0
    %1100 = vmatpush1.bf16.msra.mxu0 %v467
    %1101 = vmatprep.subr.bf16.mxu0 0
    %1102 = vmatpush1.bf16.msra.mxu0 %v470
    %1103 = vmatprep.subr.bf16.mxu0 0
    %1104 = vmatpush1.bf16.msra.mxu0 %v473
    %1105 = vmatprep.subr.bf16.mxu0 0
    %1106 = vmatpush1.bf16.msra.mxu0 %v476
    %1107 = vmatprep.subr.bf16.mxu0 0
    %1108 = vmatpush1.bf16.msra.mxu0 %v479
    %1109 = vmatprep.subr.bf16.mxu0 0
    %1110 = vmatpush1.bf16.msra.mxu0 %v482
    %1111 = vmatprep.subr.bf16.mxu0 0
    %1112 = vmatpush1.bf16.msra.mxu0 %v485
    %1113 = vmatprep.subr.bf16.mxu0 0
    %1114 = vmatpush1.bf16.msra.mxu0 0
    %1115 = vmatprep.subr.bf16.mxu0 0
    %1116 = vmatpush1.bf16.msra.mxu0 0
    %1117 = vmatprep.subr.bf16.mxu0 0
    %1118 = vmatpush1.bf16.msra.mxu0 0
    %1119 = vmatprep.subr.bf16.mxu0 0
    %1120 = vmatpush1.bf16.msra.mxu0 0
    %1121 = vmatprep.subr.bf16.mxu0 0
    %1122 = vmatpush1.bf16.msra.mxu0 0
    %1123 = vmatprep.subr.bf16.mxu0 0
    %1124 = vmatpush1.bf16.msra.mxu0 0
    %1125 = vmatprep.subr.bf16.mxu0 0
    %1126 = vmatpush1.bf16.msra.mxu0 0
    %1127 = vmatprep.subr.bf16.mxu0 0
    %1128 = vmatpush1.bf16.msra.mxu0 0
    %1129 = vmatprep.mubr.bf16.mxu0 0
    %1130 = vmatmul.mubr.bf16.gmra.mrb[0].mxu0 %v1055
    %v1131 = vpop.f32.mrb[0].mxu0
    %v1132 = vadd.f32 0.0, %v1131
    %v1133 = vpop.f32.mrb[0].mxu0
    %v1134 = vpop.f32.mrb[0].mxu0
    %v1135 = vpop.f32.mrb[0].mxu0
    %1136 = vdwg.mxu0
    %v1137 = vadd.f32 %v1052, %v1091
    %v1138 = vsub.f32 0.0, %v1137
    %v1139 = vmul.f32 %v1138, 1.442695
    %v1140 = vpow.pop %v1139
    %v1141 = vadd.f32 %v1140, 1.0
    %v1142 = vrcp.pop %v1141
    %v1143 = vadd.f32 %v1053, %v1093
    %v1144 = vsub.f32 0.0, %v1143
    %v1145 = vmul.f32 %v1144, 1.442695
    %v1146 = vpow.pop %v1145
    %v1147 = vadd.f32 %v1146, 1.0
    %v1148 = vrcp.pop %v1147
    %v1149 = vadd.f32 %v1132, %v607
    %v1150 = vmul.f32 %v1142, %v1149
    %v1151 = vadd.f32 %v1054, %v1150
    %v1152 = vtanh.pop %v1151
    %v1153 = vsub.f32 1.0, %v1148
    %v1154 = vmul.f32 %v1153, %v1152
    %v1155 = vmul.f32 %v1148, %v1048
    %v1156 = vadd.f32 %v1154, %v1155
    %s1157 = smul.u32 6, 3
    %s1158 = smul.addr %s1157, 8
    %s1159 = scalar_lea.vmem [#allocation2], %s1158
    %v1160 = vld [vmem:[%s1159] sm:$0xff]
    %v1161 = vld [vmem:[%s1159 + $0x8] sm:$0xff]
    %v1162 = vld [vmem:[%s1159 + $0x10] sm:$0xff]
    %v1163 = vpack.c.bf16 %v1156, %v1156
    %1164 = vmatprep.subr.bf16.mxu0 %v463
    %1165 = vmatpush1.bf16.msra.mxu0 %v462
    %1166 = vmatprep.subr.bf16.mxu0 %v466
    %1167 = vmatpush1.bf16.msra.mxu0 %v465
    %1168 = vmatprep.subr.bf16.mxu0 %v469
    %1169 = vmatpush1.bf16.msra.mxu0 %v468
    %1170 = vmatprep.subr.bf16.mxu0 %v472
    %1171 = vmatpush1.bf16.msra.mxu0 %v471
    %1172 = vmatprep.subr.bf16.mxu0 %v475
    %1173 = vmatpush1.bf16.msra.mxu0 %v474
    %1174 = vmatprep.subr.bf16.mxu0 %v478
    %1175 = vmatpush1.bf16.msra.mxu0 %v477
    %1176 = vmatprep.subr.bf16.mxu0 %v481
    %1177 = vmatpush1.bf16.msra.mxu0 %v480
    %1178 = vmatprep.subr.bf16.mxu0 %v484
    %1179 = vmatpush1.bf16.msra.mxu0 %v483
    %1180 = vmatprep.subr.bf16.mxu0 0
    %1181 = vmatpush1.bf16.msra.mxu0 0
    %1182 = vmatprep.subr.bf16.mxu0 0
    %1183 = vmatpush1.bf16.msra.mxu0 0
    %1184 = vmatprep.subr.bf16.mxu0 0
    %1185 = vmatpush1.bf16.msra.mxu0 0
    %1186 = vmatprep.subr.bf16.mxu0 0
    %1187 = vmatpush1.bf16.msra.mxu0 0
    %1188 = vmatprep.subr.bf16.mxu0 0
    %1189 = vmatpush1.bf16.msra.mxu0 0
    %1190 = vmatprep.subr.bf16.mxu0 0
    %1191 = vmatpush1.bf16.msra.mxu0 0
    %1192 = vmatprep.subr.bf16.mxu0 0
    %1193 = vmatpush1.bf16.msra.mxu0 0
    %1194 = vmatprep.subr.bf16.mxu0 0
    %1195 = vmatpush1.bf16.msra.mxu0 0
    %1196 = vmatprep.mubr.bf16.mxu0 0
    %1197 = vmatmul.mubr.bf16.gmra.mrb[0].mxu0 %v1163
    %v1198 = vpop.f32.mrb[0].mxu0
    %v1199 = vadd.f32 0.0, %v1198
    %v1200 = vpop.f32.mrb[0].mxu0
    %v1201 = vadd.f32 0.0, %v1200
    %v1202 = vpop.f32.mrb[0].mxu0
    %v1203 = vpop.f32.mrb[0].mxu0
    %1204 = vdwg.mxu0
    %1205 = vmatprep.subr.bf16.mxu0 0
    %1206 = vmatpush1.bf16.msra.mxu0 %v464
    %1207 = vmatprep.subr.bf16.mxu0 0
    %1208 = vmatpush1.bf16.msra.mxu0 %v467
    %1209 = vmatprep.subr.bf16.mxu0 0
    %1210 = vmatpush1.bf16.msra.mxu0 %v470
    %1211 = vmatprep.subr.bf16.mxu0 0
    %1212 = vmatpush1.bf16.msra.mxu0 %v473
    %1213 = vmatprep.subr.bf16.mxu0 0
    %1214 = vmatpush1.bf16.msra.mxu0 %v476
    %1215 = vmatprep.subr.bf16.mxu0 0
    %1216 = vmatpush1.bf16.msra.mxu0 %v479
    %1217 = vmatprep.subr.bf16.mxu0 0
    %1218 = vmatpush1.bf16.msra.mxu0 %v482
    %1219 = vmatprep.subr.bf16.mxu0 0
    %1220 = vmatpush1.bf16.msra.mxu0 %v485
    %1221 = vmatprep.subr.bf16.mxu0 0
    %1222 = vmatpush1.bf16.msra.mxu0 0
    %1223 = vmatprep.subr.bf16.mxu0 0
    %1224 = vmatpush1.bf16.msra.mxu0 0
    %1225 = vmatprep.subr.bf16.mxu0 0
    %1226 = vmatpush1.bf16.msra.mxu0 0
    %1227 = vmatprep.subr.bf16.mxu0 0
    %1228 = vmatpush1.bf16.msra.mxu0 0
    %1229 = vmatprep.subr.bf16.mxu0 0
    %1230 = vmatpush1.bf16.msra.mxu0 0
    %1231 = vmatprep.subr.bf16.mxu0 0
    %1232 = vmatpush1.bf16.msra.mxu0 0
    %1233 = vmatprep.subr.bf16.mxu0 0
    %1234 = vmatpush1.bf16.msra.mxu0 0
    %1235 = vmatprep.subr.bf16.mxu0 0
    %1236 = vmatpush1.bf16.msra.mxu0 0
    %1237 = vmatprep.mubr.bf16.mxu0 0
    %1238 = vmatmul.mubr.bf16.gmra.mrb[0].mxu0 %v1163
    %v1239 = vpop.f32.mrb[0].mxu0
    %v1240 = vadd.f32 0.0, %v1239
    %v1241 = vpop.f32.mrb[0].mxu0
    %v1242 = vpop.f32.mrb[0].mxu0
    %v1243 = vpop.f32.mrb[0].mxu0
    %1244 = vdwg.mxu0
    %v1245 = vadd.f32 %v1160, %v1199
    %v1246 = vsub.f32 0.0, %v1245
    %v1247 = vmul.f32 %v1246, 1.442695
    %v1248 = vpow.pop %v1247
    %v1249 = vadd.f32 %v1248, 1.0
    %v1250 = vrcp.pop %v1249
    %v1251 = vadd.f32 %v1161, %v1201
    %v1252 = vsub.f32 0.0, %v1251
    %v1253 = vmul.f32 %v1252, 1.442695
    %v1254 = vpow.pop %v1253
    %v1255 = vadd.f32 %v1254, 1.0
    %v1256 = vrcp.pop %v1255
    %v1257 = vadd.f32 %v1240, %v607
    %v1258 = vmul.f32 %v1250, %v1257
    %v1259 = vadd.f32 %v1162, %v1258
    %v1260 = vtanh.pop %v1259
    %v1261 = vsub.f32 1.0, %v1256
    %v1262 = vmul.f32 %v1261, %v1260
    %v1263 = vmul.f32 %v1256, %v1156
    %v1264 = vadd.f32 %v1262, %v1263
    %s1265 = smul.u32 7, 3
    %s1266 = smul.addr %s1265, 8
    %s1267 = scalar_lea.vmem [#allocation2], %s1266
    %v1268 = vld [vmem:[%s1267] sm:$0xff]
    %v1269 = vld [vmem:[%s1267 + $0x8] sm:$0xff]
    %v1270 = vld [vmem:[%s1267 + $0x10] sm:$0xff]
    %v1271 = vpack.c.bf16 %v1264, %v1264
    %1272 = vmatprep.subr.bf16.mxu0 %v463
    %1273 = vmatpush1.bf16.msra.mxu0 %v462
    %1274 = vmatprep.subr.bf16.mxu0 %v466
    %1275 = vmatpush1.bf16.msra.mxu0 %v465
    %1276 = vmatprep.subr.bf16.mxu0 %v469
    %1277 = vmatpush1.bf16.msra.mxu0 %v468
    %1278 = vmatprep.subr.bf16.mxu0 %v472
    %1279 = vmatpush1.bf16.msra.mxu0 %v471
    %1280 = vmatprep.subr.bf16.mxu0 %v475
    %1281 = vmatpush1.bf16.msra.mxu0 %v474
    %1282 = vmatprep.subr.bf16.mxu0 %v478
    %1283 = vmatpush1.bf16.msra.mxu0 %v477
    %1284 = vmatprep.subr.bf16.mxu0 %v481
    %1285 = vmatpush1.bf16.msra.mxu0 %v480
    %1286 = vmatprep.subr.bf16.mxu0 %v484
    %1287 = vmatpush1.bf16.msra.mxu0 %v483
    %1288 = vmatprep.subr.bf16.mxu0 0
    %1289 = vmatpush1.bf16.msra.mxu0 0
    %1290 = vmatprep.subr.bf16.mxu0 0
    %1291 = vmatpush1.bf16.msra.mxu0 0
    %1292 = vmatprep.subr.bf16.mxu0 0
    %1293 = vmatpush1.bf16.msra.mxu0 0
    %1294 = vmatprep.subr.bf16.mxu0 0
    %1295 = vmatpush1.bf16.msra.mxu0 0
    %1296 = vmatprep.subr.bf16.mxu0 0
    %1297 = vmatpush1.bf16.msra.mxu0 0
    %1298 = vmatprep.subr.bf16.mxu0 0
    %1299 = vmatpush1.bf16.msra.mxu0 0
    %1300 = vmatprep.subr.bf16.mxu0 0
    %1301 = vmatpush1.bf16.msra.mxu0 0
    %1302 = vmatprep.subr.bf16.mxu0 0
    %1303 = vmatpush1.bf16.msra.mxu0 0
    %1304 = vmatprep.mubr.bf16.mxu0 0
    %1305 = vmatmul.mubr.bf16.gmra.mrb[0].mxu0 %v1271
    %v1306 = vpop.f32.mrb[0].mxu0
    %v1307 = vadd.f32 0.0, %v1306
    %v1308 = vpop.f32.mrb[0].mxu0
    %v1309 = vadd.f32 0.0, %v1308
    %v1310 = vpop.f32.mrb[0].mxu0
    %v1311 = vpop.f32.mrb[0].mxu0
    %1312 = vdwg.mxu0
    %1313 = vmatprep.subr.bf16.mxu0 0
    %1314 = vmatpush1.bf16.msra.mxu0 %v464
    %1315 = vmatprep.subr.bf16.mxu0 0
    %1316 = vmatpush1.bf16.msra.mxu0 %v467
    %1317 = vmatprep.subr.bf16.mxu0 0
    %1318 = vmatpush1.bf16.msra.mxu0 %v470
    %1319 = vmatprep.subr.bf16.mxu0 0
    %1320 = vmatpush1.bf16.msra.mxu0 %v473
    %1321 = vmatprep.subr.bf16.mxu0 0
    %1322 = vmatpush1.bf16.msra.mxu0 %v476
    %1323 = vmatprep.subr.bf16.mxu0 0
    %1324 = vmatpush1.bf16.msra.mxu0 %v479
    %1325 = vmatprep.subr.bf16.mxu0 0
    %1326 = vmatpush1.bf16.msra.mxu0 %v482
    %1327 = vmatprep.subr.bf16.mxu0 0
    %1328 = vmatpush1.bf16.msra.mxu0 %v485
    %1329 = vmatprep.subr.bf16.mxu0 0
    %1330 = vmatpush1.bf16.msra.mxu0 0
    %1331 = vmatprep.subr.bf16.mxu0 0
    %1332 = vmatpush1.bf16.msra.mxu0 0
    %1333 = vmatprep.subr.bf16.mxu0 0
    %1334 = vmatpush1.bf16.msra.mxu0 0
    %1335 = vmatprep.subr.bf16.mxu0 0
    %1336 = vmatpush1.bf16.msra.mxu0 0
    %1337 = vmatprep.subr.bf16.mxu0 0
    %1338 = vmatpush1.bf16.msra.mxu0 0
    %1339 = vmatprep.subr.bf16.mxu0 0
    %1340 = vmatpush1.bf16.msra.mxu0 0
    %1341 = vmatprep.subr.bf16.mxu0 0
    %1342 = vmatpush1.bf16.msra.mxu0 0
    %1343 = vmatprep.subr.bf16.mxu0 0
    %1344 = vmatpush1.bf16.msra.mxu0 0
    %1345 = vmatprep.mubr.bf16.mxu0 0
    %1346 = vmatmul.mubr.bf16.gmra.mrb[0].mxu0 %v1271
    %v1347 = vpop.f32.mrb[0].mxu0
    %v1348 = vadd.f32 0.0, %v1347
    %v1349 = vpop.f32.mrb[0].mxu0
    %v1350 = vpop.f32.mrb[0].mxu0
    %v1351 = vpop.f32.mrb[0].mxu0
    %1352 = vdwg.mxu0
    %v1353 = vadd.f32 %v1268, %v1307
    %v1354 = vsub.f32 0.0, %v1353
    %v1355 = vmul.f32 %v1354, 1.442695
    %v1356 = vpow.pop %v1355
    %v1357 = vadd.f32 %v1356, 1.0
    %v1358 = vrcp.pop %v1357
    %v1359 = vadd.f32 %v1269, %v1309
    %v1360 = vsub.f32 0.0, %v1359
    %v1361 = vmul.f32 %v1360, 1.442695
    %v1362 = vpow.pop %v1361
    %v1363 = vadd.f32 %v1362, 1.0
    %v1364 = vrcp.pop %v1363
    %v1365 = vadd.f32 %v1348, %v607
    %v1366 = vmul.f32 %v1358, %v1365
    %v1367 = vadd.f32 %v1270, %v1366
    %v1368 = vtanh.pop %v1367
    %v1369 = vsub.f32 1.0, %v1364
    %v1370 = vmul.f32 %v1369, %v1368
    %v1371 = vmul.f32 %v1364, %v1264
    %v1372 = vadd.f32 %v1370, %v1371
    %v1373 = vpack.c.bf16 %v1372, %v1372
    %v1374 = vld [vmem:[#allocation9] sm:$0xf]
    %v1375 = vld [vmem:[#allocation9 + $0x4] sm:$0xf]
    %v1376 = vld [vmem:[#allocation9 + $0x8] sm:$0xf]
    %v1377 = vld [vmem:[#allocation9 + $0xc] sm:$0xf]
    %v1378 = vld [vmem:[#allocation9 + $0x10] sm:$0xf]
    %v1379 = vld [vmem:[#allocation9 + $0x14] sm:$0xf]
    %v1380 = vld [vmem:[#allocation9 + $0x18] sm:$0xf]
    %v1381 = vld [vmem:[#allocation9 + $0x1c] sm:$0xf]
    %v1382 = vld [vmem:[#allocation9 + $0x20] sm:$0xf]
    %v1383 = vld [vmem:[#allocation9 + $0x24] sm:$0xf]
    %v1384 = vld [vmem:[#allocation9 + $0x28] sm:$0xf]
    %v1385 = vld [vmem:[#allocation9 + $0x2c] sm:$0xf]
    %v1386 = vld [vmem:[#allocation9 + $0x30] sm:$0xf]
    %v1387 = vld [vmem:[#allocation9 + $0x34] sm:$0xf]
    %v1388 = vld [vmem:[#allocation9 + $0x38] sm:$0xf]
    %v1389 = vld [vmem:[#allocation9 + $0x3c] sm:$0xf]
    %v1390 = vld [vmem:[%s6] sm:$0x1]
    %v1392 = vlaneseq
    %v1393 = vshrl.u32 %v1392, 7
    %v1394 = vsub.s32 0, %v1393
    %v1395 = vrot.slane %v1390, %v1394
    %v1413 = vunpack.c.l.b16 %v1374
    %v1414 = vunpack.c.l.b16 %v1375
    %v1415 = vunpack.c.l.b16 %v1376
    %v1416 = vunpack.c.l.b16 %v1377
    %v1417 = vunpack.c.l.b16 %v1378
    %v1418 = vunpack.c.l.b16 %v1379
    %v1419 = vunpack.c.l.b16 %v1380
    %v1420 = vunpack.c.l.b16 %v1381
    %v1421 = vunpack.c.l.b16 %v1382
    %v1422 = vunpack.c.l.b16 %v1383
    %v1423 = vunpack.c.l.b16 %v1384
    %v1424 = vunpack.c.l.b16 %v1385
    %v1425 = vunpack.c.l.b16 %v1386
    %v1426 = vunpack.c.l.b16 %v1387
    %v1427 = vunpack.c.l.b16 %v1388
    %v1428 = vunpack.c.l.b16 %v1389
    %v1429 = vpack.c.b16 %v1414, %v1413
    %v1430 = vpack.c.b16 %v1416, %v1415
    %v1431 = vpack.c.b16 %v1418, %v1417
    %v1432 = vpack.c.b16 %v1420, %v1419
    %v1433 = vpack.c.b16 %v1422, %v1421
    %v1434 = vpack.c.b16 %v1424, %v1423
    %v1435 = vpack.c.b16 %v1426, %v1425
    %v1436 = vpack.c.b16 %v1428, %v1427
    %1445 = vmatprep.subr.bf16.mxu0 0
    %1446 = vmatpush1.bf16.msra.mxu0 %v1429
    %1447 = vmatprep.subr.bf16.mxu0 0
    %1448 = vmatpush1.bf16.msra.mxu0 %v1430
    %1449 = vmatprep.subr.bf16.mxu0 0
    %1450 = vmatpush1.bf16.msra.mxu0 %v1431
    %1451 = vmatprep.subr.bf16.mxu0 0
    %1452 = vmatpush1.bf16.msra.mxu0 %v1432
    %1453 = vmatprep.subr.bf16.mxu0 0
    %1454 = vmatpush1.bf16.msra.mxu0 %v1433
    %1455 = vmatprep.subr.bf16.mxu0 0
    %1456 = vmatpush1.bf16.msra.mxu0 %v1434
    %1457 = vmatprep.subr.bf16.mxu0 0
    %1458 = vmatpush1.bf16.msra.mxu0 %v1435
    %1459 = vmatprep.subr.bf16.mxu0 0
    %1460 = vmatpush1.bf16.msra.mxu0 %v1436
    %1461 = vmatprep.subr.bf16.mxu0 0
    %1462 = vmatpush1.bf16.msra.mxu0 0
    %1463 = vmatprep.subr.bf16.mxu0 0
    %1464 = vmatpush1.bf16.msra.mxu0 0
    %1465 = vmatprep.subr.bf16.mxu0 0
    %1466 = vmatpush1.bf16.msra.mxu0 0
    %1467 = vmatprep.subr.bf16.mxu0 0
    %1468 = vmatpush1.bf16.msra.mxu0 0
    %1469 = vmatprep.subr.bf16.mxu0 0
    %1470 = vmatpush1.bf16.msra.mxu0 0
    %1471 = vmatprep.subr.bf16.mxu0 0
    %1472 = vmatpush1.bf16.msra.mxu0 0
    %1473 = vmatprep.subr.bf16.mxu0 0
    %1474 = vmatpush1.bf16.msra.mxu0 0
    %1475 = vmatprep.subr.bf16.mxu0 0
    %1476 = vmatpush1.bf16.msra.mxu0 0
    %1477 = vmatprep.mubr.bf16.mxu0 0
    %1478 = vmatmul.mubr.bf16.gmra.mrb[0].mxu0 %v1373
    %v1479 = vpop.f32.mrb[0].mxu0
    %v1480 = vadd.f32 %v1395, %v1479
    %v1481 = vpop.f32.mrb[0].mxu0
    %v1482 = vpop.f32.mrb[0].mxu0
    %v1483 = vpop.f32.mrb[0].mxu0
    %1484 = vdwg.mxu0
    %1485 = vst [vmem:[#allocation11] sm:$0xff] %v1480
    // Predicated region
    $region46: #{tpu_custom_call.1} parent=1 // pred_check
      _
    $region47: #{tpu_custom_call.1} parent=1 // pred_check_branch
      %1487 = sbr.rel (0) target = $region49
    $region48: #{tpu_custom_call.1} parent=1 // pred_region
      %s1489 = ssub.s32 128, 128
      %1490 = vsyncadd [#allocation5], %s1489
      %s1492 = sshll.u32 [#allocation11], 4
      %s1493 = int_to_ptr.vmem [resolvable:$true] %s1492
      %1495 = dma.vmem_to_hbm [thread:$0]  %s1493, 128, %s7, [#allocation5]
    $region49: #{tpu_custom_call.1} parent=1 // pred_fallthru
      _
    // Predicated region
    $region50: #{tpu_custom_call.1} parent=1 // pred_check
      _
    $region51: #{tpu_custom_call.1} parent=1 // pred_check_branch
      %1497 = sbr.rel (0) target = $region53
    $region52: #{tpu_custom_call.1} parent=1 // pred_region
      %1498 = dma.done [#allocation5], 128
    $region53: #{tpu_custom_call.1} parent=1 // pred_fallthru
      _
    %1499 = vsyncpa [#allocation4], 1
    %1500 = vsyncpa [#allocation7], 1
    %1501 = vsyncpa [#allocation10], 1
    %1502 = vsyncpa [#allocation5], 1

</llo_original>
